<compile_context>
chip_gen: v6e
topology: v6e:2x2x1
jax: 0.10.0
libtpu: 0.0.40
codegen_flags: <defaults>
</compile_context>

<pallas_src>
import jax
import jax.numpy as jnp
from jax.experimental import pallas as pl
from jax.experimental.pallas import tpu as pltpu


# ---------------------------------------------------------------- kernels ---

def _encoder_kernel(x_ref, w_ref, b_ref, codes_ref):
    """codes = relu(x @ [wc|ws] + [bc|bs]), accumulated over the D (K) axis."""
    k = pl.program_id(0)

    @pl.when(k == 0)
    def _():
        codes_ref[...] = jnp.zeros_like(codes_ref)

    # bf16 x bf16 -> f32 accumulation on the MXU.
    codes_ref[...] += jnp.dot(x_ref[...], w_ref[...],
                              preferred_element_type=jnp.float32)

    @pl.when(k == pl.num_programs(0) - 1)
    def _():
        codes_ref[...] = jnp.maximum(codes_ref[...] + b_ref[...], 0.0)


def _decoder_kernel(codes_ref, w_ref, b_ref, gen_ref):
    """One output-D tile of gen = sigmoid(codes @ [wdc;wds] + bd)."""
    h = jnp.dot(codes_ref[...], w_ref[...],
                preferred_element_type=jnp.float32) + b_ref[...]
    gen_ref[...] = jax.nn.sigmoid(h)          # exp + recip -> EUP, free slot


# ---------------------------------------------------------------- wrapper ---

def autoencoder_forward(img_nchw, params, *, tile_k=512, tile_n=512):
    """Fused LORD AutoEncoder.forward.

    Returns (generated_img, content_code, class_code), matching
    AutoEncoder.forward(img) == convert(img, img).
    """
    B, C, H, W = img_nchw.shape
    D = C * H * W
    wc, bc, ws, bs, wdc, wds, bd = params
    ZC = wc.shape[1]
    ZS = ws.shape[1]
    Z = ZC + ZS

    # glue: NCHW -> (B, D); pad batch to the 8-row f32 sublane tile.
    x = img_nchw.reshape(B, D).astype(jnp.float32)
    Bp = max(8, -(-B // 8) * 8)
    if Bp != B:
        x = jnp.pad(x, ((0, Bp - B), (0, 0)))
    x_bf16 = x.astype(jnp.bfloat16)

    # Fuse the two encoders / two decoder halves ONCE; weights in bf16,
    # biases stay f32 (elementwise math stays f32 everywhere).
    w_enc = jnp.concatenate([wc, ws], axis=1).astype(jnp.bfloat16)    # (D, Z)
    b_enc = jnp.concatenate([bc, bs], axis=1)                         # (1, Z) f32
    w_dec = jnp.concatenate([wdc, wds], axis=0).astype(jnp.bfloat16)  # (Z, D)
    # bd stays (1, D) f32

    tk = min(tile_k, D)
    tn = min(tile_n, D)
    assert D % tk == 0 and D % tn == 0, "D must divide the tile sizes"
    assert Z % 128 == 0, "fused code width must be lane-aligned"

    # ---- encoder: grid over D as the reduction axis ("arbitrary"),
    #      resident f32 accumulator output, bias+ReLU on the last step.
    codes = pl.pallas_call(
        _encoder_kernel,
        out_shape=jax.ShapeDtypeStruct((Bp, Z), jnp.float32),
        grid=(D // tk,),
        in_specs=[
            pl.BlockSpec((Bp, tk), lambda k: (0, k)),   # x tile (streamed)
            pl.BlockSpec((tk, Z), lambda k: (k, 0)),    # weight tile (streamed, dbl-buffered)
            pl.BlockSpec((1, Z), lambda k: (0, 0)),     # bias (fetched once)
        ],
        out_specs=pl.BlockSpec((Bp, Z), lambda k: (0, 0)),
        compiler_params=pltpu.CompilerParams(
            dimension_semantics=("arbitrary",)),
    )(x_bf16, w_enc, b_enc)

    # ---- decoder: grid over the output-D axis ("parallel" -> both v7x TCs),
    #      codes resident in VMEM across all iterations.
    codes_bf16 = codes.astype(jnp.bfloat16)
    gen_flat = pl.pallas_call(
        _decoder_kernel,
        out_shape=jax.ShapeDtypeStruct((Bp, D), jnp.float32),
        grid=(D // tn,),
        in_specs=[
            pl.BlockSpec((Bp, Z), lambda j: (0, 0)),    # codes (resident)
            pl.BlockSpec((Z, tn), lambda j: (0, j)),    # weight tile (streamed)
            pl.BlockSpec((1, tn), lambda j: (0, j)),    # bias tile
        ],
        out_specs=pl.BlockSpec((Bp, tn), lambda j: (0, j)),   # lane-dense 512-wide store
        compiler_params=pltpu.CompilerParams(
            dimension_semantics=("parallel",)),
    )(codes_bf16, w_dec, bd)

    generated_img = gen_flat[:B].reshape(B, C, H, W)   # glue: (B, D) -> NCHW
    content_code = codes[:B, :ZC]
    class_code = codes[:B, ZC:]
    return generated_img, content_code, class_code


# -------------------------------------------------------- params/reference --

def init_params(key, D, ZC, ZS):
    """Deterministic synthetic parameter init (fan-in scaled normals)."""
    ks = jax.random.split(key, 5)
    wc = jax.random.normal(ks[0], (D, ZC), jnp.float32) * (1.0 / jnp.sqrt(D))
    bc = jnp.zeros((1, ZC), jnp.float32)
    ws = jax.random.normal(ks[1], (D, ZS), jnp.float32) * (1.0 / jnp.sqrt(D))
    bs = jnp.zeros((1, ZS), jnp.float32)
    wdc = jax.random.normal(ks[2], (ZC, D), jnp.float32) * (1.0 / jnp.sqrt(ZC + ZS))
    wds = jax.random.normal(ks[3], (ZS, D), jnp.float32) * (1.0 / jnp.sqrt(ZC + ZS))
    bd = jnp.zeros((1, D), jnp.float32)
    return wc, bc, ws, bs, wdc, wds, bd


def _reference(img_nchw, params):
    """Plain-JAX f32 reference of the module forward."""
    B, C, H, W = img_nchw.shape
    D = C * H * W
    wc, bc, ws, bs, wdc, wds, bd = params
    x = img_nchw.reshape(B, D).astype(jnp.float32)
    cc = jnp.maximum(x @ wc + bc, 0.0)
    sc = jnp.maximum(x @ ws + bs, 0.0)
    gen = jax.nn.sigmoid(cc @ wdc + sc @ wds + bd)
    return gen.reshape(B, C, H, W), cc, sc


# ------------------------------------------------------------------- main ---

if __name__ == "__main__":
    # Small shapes consistent with the module's forward (NCHW image input).
    B, C, H, W = 2, 4, 16, 16
    D = C * H * W          # 1024
    ZC, ZS = 128, 128      # fused code width 256 == v6e/v7x MXU width

    key = jax.random.PRNGKey(0)
    k_img, k_par = jax.random.split(key)
    img = jax.random.normal(k_img, (B, C, H, W), jnp.float32)
    params = init_params(k_par, D, ZC, ZS)

    fwd = jax.jit(autoencoder_forward)
    generated_img, content_code, class_code = jax.block_until_ready(fwd(img, params))

    assert generated_img.shape == (B, C, H, W)
    assert content_code.shape == (B, ZC)
    assert class_code.shape == (B, ZS)

    # Validate against the f32 reference (bf16 weights -> loose tolerance).
    ref_gen, ref_cc, ref_sc = _reference(img, params)
    assert jnp.allclose(content_code, ref_cc, atol=5e-2, rtol=5e-2)
    assert jnp.allclose(class_code, ref_sc, atol=5e-2, rtol=5e-2)
    assert jnp.allclose(generated_img, ref_gen, atol=5e-2, rtol=5e-2)

    print("KERNEL_OK")
</pallas_src>

<mosaic_0001>
module attributes {stable_mosaic.version = 11 : i64} {
  func.func @_encoder_kernel(%arg0: i32, %arg1: memref<8x512xbf16, #tpu.memory_space<vmem>>, %arg2: memref<512x256xbf16, #tpu.memory_space<vmem>>, %arg3: memref<1x256xf32, #tpu.memory_space<vmem>>, %arg4: memref<8x256xf32, #tpu.memory_space<vmem>>) attributes {dimension_semantics = [#tpu.dimension_semantics<arbitrary>], iteration_bounds = array<i64: 2>, scalar_prefetch = 0 : i64, scratch_operands = 0 : i64, tpu.core_type = #tpu.core_type<tc>, window_params = [{transform_indices = @transform_0, window_bounds = array<i64: 8, 512>}, {transform_indices = @transform_1, window_bounds = array<i64: 512, 256>}, {pipeline_mode = #tpu.pipeline_mode<synchronous>, transform_indices = @transform_2, window_bounds = array<i64: 1, 256>}, {pipeline_mode = #tpu.pipeline_mode<synchronous>, transform_indices = @transform_3, window_bounds = array<i64: 8, 256>}]} {
    %c0_i32 = arith.constant 0 : i32
    %0 = arith.cmpi eq, %arg0, %c0_i32 : i32
    %1 = arith.extui %0 : i1 to i32
    %c0_i32_0 = arith.constant 0 : i32
    %2 = arith.cmpi ne, %1, %c0_i32_0 : i32
    scf.if %2 {
      %cst_9 = arith.constant 0.000000e+00 : f32
      %12 = vector.broadcast %cst_9 : f32 to vector<8x256xf32>
      %c0_10 = arith.constant 0 : index
      %c0_11 = arith.constant 0 : index
      %13 = vector.load %arg4[%c0_10, %c0_11] : memref<8x256xf32, #tpu.memory_space<vmem>>, vector<8x256xf32>
      tpu.vector_store %arg4[%c0_10, %c0_11], %12 {strides = array<i32>} : memref<8x256xf32, #tpu.memory_space<vmem>>, vector<8x256xf32>,
    } else {
    }
    %c0 = arith.constant 0 : index
    %c0_1 = arith.constant 0 : index
    %3 = vector.load %arg4[%c0, %c0_1] : memref<8x256xf32, #tpu.memory_space<vmem>>, vector<8x256xf32>
    %c0_2 = arith.constant 0 : index
    %c0_3 = arith.constant 0 : index
    %4 = vector.load %arg1[%c0_2, %c0_3] : memref<8x512xbf16, #tpu.memory_space<vmem>>, vector<8x512xbf16>
    %c0_4 = arith.constant 0 : index
    %c0_5 = arith.constant 0 : index
    %5 = vector.load %arg2[%c0_4, %c0_5] : memref<512x256xbf16, #tpu.memory_space<vmem>>, vector<512x256xbf16>
    %cst = arith.constant dense<0.000000e+00> : vector<8x256xf32>
    %6 = tpu.matmul %4, %5, %cst {dimension_numbers = #tpu.dot_dimension_numbers<[1], [0], [0], [1], [0, 0, 1, 1], [], []>} : vector<8x512xbf16>, vector<512x256xbf16>, vector<8x256xf32> -> vector<8x256xf32>
    %7 = arith.addf %3, %6 : vector<8x256xf32>
    %c0_6 = arith.constant 0 : index
    %c0_7 = arith.constant 0 : index
    %8 = vector.load %arg4[%c0_6, %c0_7] : memref<8x256xf32, #tpu.memory_space<vmem>>, vector<8x256xf32>
    tpu.vector_store %arg4[%c0_6, %c0_7], %7 {strides = array<i32>} : memref<8x256xf32, #tpu.memory_space<vmem>>, vector<8x256xf32>,
    %c1_i32 = arith.constant 1 : i32
    %9 = arith.cmpi eq, %arg0, %c1_i32 : i32
    %10 = arith.extui %9 : i1 to i32
    %c0_i32_8 = arith.constant 0 : i32
    %11 = arith.cmpi ne, %10, %c0_i32_8 : i32
    scf.if %11 {
      %c0_9 = arith.constant 0 : index
      %c0_10 = arith.constant 0 : index
      %12 = vector.load %arg4[%c0_9, %c0_10] : memref<8x256xf32, #tpu.memory_space<vmem>>, vector<8x256xf32>
      %c0_11 = arith.constant 0 : index
      %c0_12 = arith.constant 0 : index
      %13 = vector.load %arg3[%c0_11, %c0_12] : memref<1x256xf32, #tpu.memory_space<vmem>>, vector<1x256xf32>
      %14 = vector.broadcast %13 : vector<1x256xf32> to vector<8x256xf32>
      %15 = arith.addf %12, %14 : vector<8x256xf32>
      %cst_13 = arith.constant 0.000000e+00 : f32
      %16 = vector.broadcast %cst_13 : f32 to vector<8x256xf32>
      %17 = arith.maximumf %15, %16 : vector<8x256xf32>
      %c0_14 = arith.constant 0 : index
      %c0_15 = arith.constant 0 : index
      %18 = vector.load %arg4[%c0_14, %c0_15] : memref<8x256xf32, #tpu.memory_space<vmem>>, vector<8x256xf32>
      tpu.vector_store %arg4[%c0_14, %c0_15], %17 {strides = array<i32>} : memref<8x256xf32, #tpu.memory_space<vmem>>, vector<8x256xf32>,
    } else {
    }
    return
  }
  func.func @transform_0(%arg0: i32) -> (i32, i32) {
    %c0_i32 = arith.constant 0 : i32
    %c0_i32_0 = arith.constant 0 : i32
    return %c0_i32, %arg0 : i32, i32
  }
  func.func @transform_1(%arg0: i32) -> (i32, i32) {
    %c0_i32 = arith.constant 0 : i32
    %c0_i32_0 = arith.constant 0 : i32
    return %arg0, %c0_i32 : i32, i32
  }
  func.func @transform_2(%arg0: i32) -> (i32, i32) {
    %c0_i32 = arith.constant 0 : i32
    %c0_i32_0 = arith.constant 0 : i32
    %c0_i32_1 = arith.constant 0 : i32
    return %c0_i32, %c0_i32_0 : i32, i32
  }
  func.func @transform_3(%arg0: i32) -> (i32, i32) {
    %c0_i32 = arith.constant 0 : i32
    %c0_i32_0 = arith.constant 0 : i32
    %c0_i32_1 = arith.constant 0 : i32
    return %c0_i32, %c0_i32_0 : i32, i32
  }
}

module attributes {stable_mosaic.version = 11 : i64} {
  func.func @_decoder_kernel(%arg0: i32, %arg1: memref<8x256xbf16, #tpu.memory_space<vmem>>, %arg2: memref<256x512xbf16, #tpu.memory_space<vmem>>, %arg3: memref<1x512xf32, #tpu.memory_space<vmem>>, %arg4: memref<8x512xf32, #tpu.memory_space<vmem>>) attributes {dimension_semantics = [#tpu.dimension_semantics<parallel>], iteration_bounds = array<i64: 2>, scalar_prefetch = 0 : i64, scratch_operands = 0 : i64, tpu.core_type = #tpu.core_type<tc>, window_params = [{pipeline_mode = #tpu.pipeline_mode<synchronous>, transform_indices = @transform_0, window_bounds = array<i64: 8, 256>}, {transform_indices = @transform_1, window_bounds = array<i64: 256, 512>}, {transform_indices = @transform_2, window_bounds = array<i64: 1, 512>}, {transform_indices = @transform_3, window_bounds = array<i64: 8, 512>}]} {
    %c0 = arith.constant 0 : index
    %c0_0 = arith.constant 0 : index
    %0 = vector.load %arg1[%c0, %c0_0] : memref<8x256xbf16, #tpu.memory_space<vmem>>, vector<8x256xbf16>
    %c0_1 = arith.constant 0 : index
    %c0_2 = arith.constant 0 : index
    %1 = vector.load %arg2[%c0_1, %c0_2] : memref<256x512xbf16, #tpu.memory_space<vmem>>, vector<256x512xbf16>
    %cst = arith.constant dense<0.000000e+00> : vector<8x512xf32>
    %2 = tpu.matmul %0, %1, %cst {dimension_numbers = #tpu.dot_dimension_numbers<[1], [0], [0], [1], [0, 0, 1, 1], [], []>} : vector<8x256xbf16>, vector<256x512xbf16>, vector<8x512xf32> -> vector<8x512xf32>
    %c0_3 = arith.constant 0 : index
    %c0_4 = arith.constant 0 : index
    %3 = vector.load %arg3[%c0_3, %c0_4] : memref<1x512xf32, #tpu.memory_space<vmem>>, vector<1x512xf32>
    %4 = vector.broadcast %3 : vector<1x512xf32> to vector<8x512xf32>
    %5 = arith.addf %2, %4 : vector<8x512xf32>
    %6 = arith.negf %5 : vector<8x512xf32>
    %7 = math.exp %6 : vector<8x512xf32>
    %cst_5 = arith.constant 1.000000e+00 : f32
    %8 = vector.broadcast %cst_5 : f32 to vector<8x512xf32>
    %9 = arith.addf %8, %7 : vector<8x512xf32>
    %10 = arith.divf %8, %9 : vector<8x512xf32>
    %c0_6 = arith.constant 0 : index
    %c0_7 = arith.constant 0 : index
    %11 = vector.load %arg4[%c0_6, %c0_7] : memref<8x512xf32, #tpu.memory_space<vmem>>, vector<8x512xf32>
    tpu.vector_store %arg4[%c0_6, %c0_7], %10 {strides = array<i32>} : memref<8x512xf32, #tpu.memory_space<vmem>>, vector<8x512xf32>,
    return
  }
  func.func @transform_0(%arg0: i32) -> (i32, i32) {
    %c0_i32 = arith.constant 0 : i32
    %c0_i32_0 = arith.constant 0 : i32
    %c0_i32_1 = arith.constant 0 : i32
    return %c0_i32, %c0_i32_0 : i32, i32
  }
  func.func @transform_1(%arg0: i32) -> (i32, i32) {
    %c0_i32 = arith.constant 0 : i32
    %c0_i32_0 = arith.constant 0 : i32
    return %c0_i32, %arg0 : i32, i32
  }
  func.func @transform_2(%arg0: i32) -> (i32, i32) {
    %c0_i32 = arith.constant 0 : i32
    %c0_i32_0 = arith.constant 0 : i32
    return %c0_i32, %arg0 : i32, i32
  }
  func.func @transform_3(%arg0: i32) -> (i32, i32) {
    %c0_i32 = arith.constant 0 : i32
    %c0_i32_0 = arith.constant 0 : i32
    return %c0_i32, %arg0 : i32, i32
  }
}

</mosaic_0001>

<llo_original>
// kernel: autoencoder_forward.2
$region0: #{autoencoder_forward.2}
  #allocation0 [shape = 'u32[]', space=smem, size = 0x4, offset = 0x4, fixed_abs, tag = 'smem constant byte address 0x4 - core index']
  #allocation1 [shape = 'u32[144,128]{1,0:T(1,128)}', space=vmem, size = 0x12000, scoped, tag = 'internal scratch']
  %s0 = inlined_call_operand.vmem [shape: bf16[8,1024], index: 0, kind: input, shape index: {}]
  %s1 = inlined_call_operand.vmem [shape: bf16[1024,256], index: 1, kind: input, shape index: {}]
  %s2 = inlined_call_operand.vmem [shape: f32[1,256], index: 2, kind: input, shape index: {}]
  %s3 = inlined_call_operand.vmem [shape: f32[8,256], index: 3, kind: output, shape index: {}]
  %s4 = sld [smem:[#allocation0]]
  $region53: #{autoencoder_forward.2} parent=0
    _
  %s6 = ssub.s32 1, %s4
  %s7 = scalar_select 0, %s6, %s4
  loop: start=0, step=1, limit=4
  $region2: #{autoencoder_forward.2} parent=0 // loop_pre_header
    _
  $region3: #{autoencoder_forward.2} parent=0 // loop_header
    %s9 = sphi 0, %s13
    %p10 = scmp.ge.s32.totalorder %s9, 4
    %s19 = sphi 0, %s21
    %s22 = sphi 0, %s19
    %s23 = sphi 0, %s22
    %s39 = sphi 0, %s23
    %s45 = sphi 0, %s47
    %s48 = sphi 0, %s45
    %s49 = sphi 0, %s48
    %s65 = sphi 0, %s49
    %s69 = sphi 0, %s69
    %s71 = sphi 0, %s69
    %s72 = sphi 0, %s71
    %s86 = sphi 0, %s72
    %s90 = sphi 0, %s90
    %s92 = sphi 0, %s90
    %s93 = sphi 0, %s92
    %s107 = sphi 0, %s93
  $region4: #{autoencoder_forward.2} parent=0 // loop_header_branch
    %12 = sbr.rel (%p10) target = $region8
  $region5: #{autoencoder_forward.2} parent=0 // loop_body
    %s14 = ssub.s32 %s9, 1
    %s15 = ssub.s32 %s9, 2
    %s16 = sadd.s32 %s9, 1
    %s17 = ssub.s32 %s9, %s16
    %p18 = scmp.eq.s32.totalorder %s17, 0
    %s20 = sadd.s32 %s19, 1
    %s21 = scalar_select %p18, %s19, %s20
    %p24 = pneg %p18
    %p25 = scmp.eq.s32.totalorder %s9, 1
    %p26 = por %p24, %p25
    %p27 = scmp.ne.s32.totalorder %s19, %s22
    %p28 = scmp.eq.s32.totalorder %s9, 0
    %p29 = por %p27, %p28
    %p30 = scmp.ne.s32.totalorder %s19, %s22
    %p31 = scmp.eq.s32.totalorder %s14, 1
    %p32 = por %p30, %p31
    %p33 = scmp.ne.s32.totalorder %s22, %s23
    %p34 = scmp.eq.s32.totalorder %s14, 0
    %p35 = por %p33, %p34
    %p36 = scmp.ne.s32.totalorder %s22, %s23
    %p37 = scmp.eq.s32.totalorder %s15, 1
    %p38 = por %p36, %p37
    %p40 = scmp.ne.s32.totalorder %s23, %s39
    %p41 = scmp.eq.s32.totalorder %s15, 0
    %p42 = por %p40, %p41
    %s43 = ssub.s32 %s9, %s16
    %p44 = scmp.eq.s32.totalorder %s43, 0
    %s46 = sadd.s32 %s45, 1
    %s47 = scalar_select %p44, %s45, %s46
    %p50 = pneg %p44
    %p51 = scmp.eq.s32.totalorder %s9, 1
    %p52 = por %p50, %p51
    %p53 = scmp.ne.s32.totalorder %s45, %s48
    %p54 = scmp.eq.s32.totalorder %s9, 0
    %p55 = por %p53, %p54
    %p56 = scmp.ne.s32.totalorder %s45, %s48
    %p57 = scmp.eq.s32.totalorder %s14, 1
    %p58 = por %p56, %p57
    %p59 = scmp.ne.s32.totalorder %s48, %s49
    %p60 = scmp.eq.s32.totalorder %s14, 0
    %p61 = por %p59, %p60
    %p62 = scmp.ne.s32.totalorder %s48, %s49
    %p63 = scmp.eq.s32.totalorder %s15, 1
    %p64 = por %p62, %p63
    %p66 = scmp.ne.s32.totalorder %s49, %s65
    %p67 = scmp.eq.s32.totalorder %s15, 0
    %p68 = por %p66, %p67
    %s70 = sadd.s32 %s69, 1
    %p73 = scmp.eq.s32.totalorder %s9, 1
    %p74 = scmp.ne.s32.totalorder %s69, %s71
    %p75 = scmp.eq.s32.totalorder %s9, 0
    %p76 = por %p74, %p75
    %p77 = scmp.ne.s32.totalorder %s69, %s71
    %p78 = scmp.eq.s32.totalorder %s14, 1
    %p79 = por %p77, %p78
    %p80 = scmp.ne.s32.totalorder %s71, %s72
    %p81 = scmp.eq.s32.totalorder %s14, 0
    %p82 = por %p80, %p81
    %p83 = scmp.ne.s32.totalorder %s71, %s72
    %p84 = scmp.eq.s32.totalorder %s15, 1
    %p85 = por %p83, %p84
    %p87 = scmp.ne.s32.totalorder %s72, %s86
    %p88 = scmp.eq.s32.totalorder %s15, 0
    %p89 = por %p87, %p88
    %s91 = sadd.s32 %s90, 1
    %p94 = scmp.eq.s32.totalorder %s9, 1
    %p95 = scmp.ne.s32.totalorder %s90, %s92
    %p96 = scmp.eq.s32.totalorder %s9, 0
    %p97 = por %p95, %p96
    %p98 = scmp.ne.s32.totalorder %s90, %s92
    %p99 = scmp.eq.s32.totalorder %s14, 1
    %p100 = por %p98, %p99
    %p101 = scmp.ne.s32.totalorder %s92, %s93
    %p102 = scmp.eq.s32.totalorder %s14, 0
    %p103 = por %p101, %p102
    %p104 = scmp.ne.s32.totalorder %s92, %s93
    %p105 = scmp.eq.s32.totalorder %s15, 1
    %p106 = por %p104, %p105
    %p108 = scmp.ne.s32.totalorder %s93, %s107
    %p109 = scmp.eq.s32.totalorder %s15, 0
    %p110 = por %p108, %p109
    %p111 = scmp.le.s32.totalorder 1, %s9
    %p112 = scmp.lt.s32.totalorder %s9, 3
    %p113 = pnand %p111, %p112
    %p114 = pneg %p113
    // Predicated region
    $region9: #{autoencoder_forward.2} parent=5 // pred_check
      _
    $region10: #{autoencoder_forward.2} parent=5 // pred_check_branch
      %116 = sbr.rel (%p113) target = $region12
    $region11: #{autoencoder_forward.2} parent=5 // pred_region
      %s117 = ssub.s32 %s9, 1
      // Predicated region
      $region13: #{autoencoder_forward.2} parent=11 // pred_check
        %p118 = pneg %p82
      $region14: #{autoencoder_forward.2} parent=11 // pred_check_branch
        %120 = sbr.rel (%p118) target = $region16
      $region15: #{autoencoder_forward.2} parent=11 // pred_region
        _
      $region16: #{autoencoder_forward.2} parent=11 // pred_fallthru
        _
    $region12: #{autoencoder_forward.2} parent=5 // pred_fallthru
      _
    %p121 = scmp.lt.s32.totalorder %s9, 2
    // Predicated region
    $region17: #{autoencoder_forward.2} parent=5 // pred_check
      %p122 = pneg %p121
    $region18: #{autoencoder_forward.2} parent=5 // pred_check_branch
      %124 = sbr.rel (%p122) target = $region20
    $region19: #{autoencoder_forward.2} parent=5 // pred_region
      // Predicated region
      $region21: #{autoencoder_forward.2} parent=19 // pred_check
        %p125 = pneg %p29
      $region22: #{autoencoder_forward.2} parent=19 // pred_check_branch
        %127 = sbr.rel (%p125) target = $region24
      $region23: #{autoencoder_forward.2} parent=19 // pred_region
        %s128 = smul.u32 4, %s9
        %p129 = scmp.lt.s32.totalorder %s128, 7
        %s130 = scalar_select %p129, %s128, 7
        %s131 = smul.addr %s130, 4
        %s132 = scalar_lea.vmem %s0, %s131
        %s133 = smul.u32 4, %s9
      $region24: #{autoencoder_forward.2} parent=19 // pred_fallthru
        _
      // Predicated region
      $region25: #{autoencoder_forward.2} parent=19 // pred_check
        %p134 = pneg %p55
      $region26: #{autoencoder_forward.2} parent=19 // pred_check_branch
        %136 = sbr.rel (%p134) target = $region28
      $region27: #{autoencoder_forward.2} parent=19 // pred_region
        %s137 = smul.u32 64, %s9
        %p138 = scmp.lt.s32.totalorder %s137, 127
        %s139 = scalar_select %p138, %s137, 127
        %s140 = smul.addr %s139, 2
        %s141 = smul.addr %s140, 4
        %s142 = scalar_lea.vmem %s1, %s141
        %s143 = smul.u32 64, %s9
      $region28: #{autoencoder_forward.2} parent=19 // pred_fallthru
        _
    $region20: #{autoencoder_forward.2} parent=5 // pred_fallthru
      _
    %p144 = scmp.le.s32.totalorder 1, %s9
    %p145 = scmp.lt.s32.totalorder %s9, 3
    %p146 = pnand %p144, %p145
    %p147 = pneg %p146
    // Predicated region
    $region29: #{autoencoder_forward.2} parent=5 // pred_check
      _
    $region30: #{autoencoder_forward.2} parent=5 // pred_check_branch
      %149 = sbr.rel (%p146) target = $region32
    $region31: #{autoencoder_forward.2} parent=5 // pred_region
      %s150 = ssub.s32 %s9, 1
      %s151 = smul.u32 4, %s14
      %p152 = scmp.lt.s32.totalorder %s151, 7
      %s153 = scalar_select %p152, %s151, 7
      %s154 = smul.addr %s153, 4
      %s155 = scalar_lea.vmem %s0, %s154
      %p156 = pneg %p35
      %p157 = pneg %p32
      %s158 = smul.u32 64, %s14
      %p159 = scmp.lt.s32.totalorder %s158, 127
      %s160 = scalar_select %p159, %s158, 127
      %s161 = smul.addr %s160, 2
      %s162 = smul.addr %s161, 4
      %s163 = scalar_lea.vmem %s1, %s162
      %p164 = pneg %p61
      %p165 = pneg %p58
      %p166 = pneg %p82
      %p167 = pneg %p79
      %p168 = pneg %p103
      %p169 = pneg %p100
      %s170 = smul.u32 4, %s14
      %p171 = scmp.lt.s32.totalorder %s170, 7
      %s172 = scalar_select %p171, %s170, 7
      %s173 = smul.addr %s172, 4
      %s174 = scalar_lea.vmem %s0, %s173
      %s175 = smul.u32 4, %s14
      %s176 = smul.u32 64, %s14
      %p177 = scmp.lt.s32.totalorder %s176, 127
      %s178 = scalar_select %p177, %s176, 127
      %s179 = smul.addr %s178, 2
      %s180 = smul.addr %s179, 4
      %s181 = scalar_lea.vmem %s1, %s180
      %s182 = smul.u32 64, %s14
      %p183 = scmp.eq.s32.totalorder %s14, 0
      // Predicated region
      $region33: #{autoencoder_forward.2} parent=31 // pred_check
        %p184 = pneg %p183
      $region34: #{autoencoder_forward.2} parent=31 // pred_check_branch
        %186 = sbr.rel (%p184) target = $region36
      $region35: #{autoencoder_forward.2} parent=31 // pred_region
        %187 = vst [vmem:[%s3] sm:$0xff] 0.0
        %188 = vst [vmem:[%s3 + $0x8] sm:$0xff] 0.0
      $region36: #{autoencoder_forward.2} parent=31 // pred_fallthru
        _
      %v189 = vld [vmem:[%s3] sm:$0xff]
      %v190 = vld [vmem:[%s3 + $0x8] sm:$0xff]
      %v191 = vld [vmem:[%s174] sm:$0xff]
      %v192 = vld [vmem:[%s174 + $0x8] sm:$0xff]
      %v193 = vld [vmem:[%s181] sm:$0xff]
      %v194 = vld [vmem:[%s181 + $0x8] sm:$0xff]
      %v195 = vld [vmem:[%s181 + $0x10] sm:$0xff]
      %v196 = vld [vmem:[%s181 + $0x18] sm:$0xff]
      %v197 = vld [vmem:[%s181 + $0x20] sm:$0xff]
      %v198 = vld [vmem:[%s181 + $0x28] sm:$0xff]
      %v199 = vld [vmem:[%s181 + $0x30] sm:$0xff]
      %v200 = vld [vmem:[%s181 + $0x38] sm:$0xff]
      %v201 = vld [vmem:[%s181 + $0x40] sm:$0xff]
      %v202 = vld [vmem:[%s181 + $0x48] sm:$0xff]
      %v203 = vld [vmem:[%s181 + $0x50] sm:$0xff]
      %v204 = vld [vmem:[%s181 + $0x58] sm:$0xff]
      %v205 = vld [vmem:[%s181 + $0x60] sm:$0xff]
      %v206 = vld [vmem:[%s181 + $0x68] sm:$0xff]
      %v207 = vld [vmem:[%s181 + $0x70] sm:$0xff]
      %v208 = vld [vmem:[%s181 + $0x78] sm:$0xff]
      %v209 = vld [vmem:[%s181 + $0x80] sm:$0xff]
      %v210 = vld [vmem:[%s181 + $0x88] sm:$0xff]
      %v211 = vld [vmem:[%s181 + $0x90] sm:$0xff]
      %v212 = vld [vmem:[%s181 + $0x98] sm:$0xff]
      %v213 = vld [vmem:[%s181 + $0xa0] sm:$0xff]
      %v214 = vld [vmem:[%s181 + $0xa8] sm:$0xff]
      %v215 = vld [vmem:[%s181 + $0xb0] sm:$0xff]
      %v216 = vld [vmem:[%s181 + $0xb8] sm:$0xff]
      %v217 = vld [vmem:[%s181 + $0xc0] sm:$0xff]
      %v218 = vld [vmem:[%s181 + $0xc8] sm:$0xff]
      %v219 = vld [vmem:[%s181 + $0xd0] sm:$0xff]
      %v220 = vld [vmem:[%s181 + $0xd8] sm:$0xff]
      %v221 = vld [vmem:[%s181 + $0xe0] sm:$0xff]
      %v222 = vld [vmem:[%s181 + $0xe8] sm:$0xff]
      %v223 = vld [vmem:[%s181 + $0xf0] sm:$0xff]
      %v224 = vld [vmem:[%s181 + $0xf8] sm:$0xff]
      %v225 = vld [vmem:[%s181 + $0x100] sm:$0xff]
      %v226 = vld [vmem:[%s181 + $0x108] sm:$0xff]
      %v227 = vld [vmem:[%s181 + $0x110] sm:$0xff]
      %v228 = vld [vmem:[%s181 + $0x118] sm:$0xff]
      %v229 = vld [vmem:[%s181 + $0x120] sm:$0xff]
      %v230 = vld [vmem:[%s181 + $0x128] sm:$0xff]
      %v231 = vld [vmem:[%s181 + $0x130] sm:$0xff]
      %v232 = vld [vmem:[%s181 + $0x138] sm:$0xff]
      %v233 = vld [vmem:[%s181 + $0x140] sm:$0xff]
      %v234 = vld [vmem:[%s181 + $0x148] sm:$0xff]
      %v235 = vld [vmem:[%s181 + $0x150] sm:$0xff]
      %v236 = vld [vmem:[%s181 + $0x158] sm:$0xff]
      %v237 = vld [vmem:[%s181 + $0x160] sm:$0xff]
      %v238 = vld [vmem:[%s181 + $0x168] sm:$0xff]
      %v239 = vld [vmem:[%s181 + $0x170] sm:$0xff]
      %v240 = vld [vmem:[%s181 + $0x178] sm:$0xff]
      %v241 = vld [vmem:[%s181 + $0x180] sm:$0xff]
      %v242 = vld [vmem:[%s181 + $0x188] sm:$0xff]
      %v243 = vld [vmem:[%s181 + $0x190] sm:$0xff]
      %v244 = vld [vmem:[%s181 + $0x198] sm:$0xff]
      %v245 = vld [vmem:[%s181 + $0x1a0] sm:$0xff]
      %v246 = vld [vmem:[%s181 + $0x1a8] sm:$0xff]
      %v247 = vld [vmem:[%s181 + $0x1b0] sm:$0xff]
      %v248 = vld [vmem:[%s181 + $0x1b8] sm:$0xff]
      %v249 = vld [vmem:[%s181 + $0x1c0] sm:$0xff]
      %v250 = vld [vmem:[%s181 + $0x1c8] sm:$0xff]
      %v251 = vld [vmem:[%s181 + $0x1d0] sm:$0xff]
      %v252 = vld [vmem:[%s181 + $0x1d8] sm:$0xff]
      %v253 = vld [vmem:[%s181 + $0x1e0] sm:$0xff]
      %v254 = vld [vmem:[%s181 + $0x1e8] sm:$0xff]
      %v255 = vld [vmem:[%s181 + $0x1f0] sm:$0xff]
      %v256 = vld [vmem:[%s181 + $0x1f8] sm:$0xff]
      %v259 = vunpack.c.l.b16 %v191
      %v260 = vunpack.c.h.b16 %v191
      %v261 = vunpack.c.l.b16 %v192
      %v262 = vunpack.c.h.b16 %v192
      %v263 = vpack.c.b16 %v259, %v259
      %v264 = vpack.c.b16 %v260, %v260
      %v265 = vpack.c.b16 %v261, %v261
      %v266 = vpack.c.b16 %v262, %v262
      %v335 = vunpack.c.l.b16 %v193
      %v336 = vunpack.c.h.b16 %v193
      %v337 = vunpack.c.l.b16 %v194
      %v338 = vunpack.c.h.b16 %v194
      %v339 = vunpack.c.l.b16 %v195
      %v340 = vunpack.c.h.b16 %v195
      %v341 = vunpack.c.l.b16 %v196
      %v342 = vunpack.c.h.b16 %v196
      %v343 = vunpack.c.l.b16 %v197
      %v344 = vunpack.c.h.b16 %v197
      %v345 = vunpack.c.l.b16 %v198
      %v346 = vunpack.c.h.b16 %v198
      %v347 = vunpack.c.l.b16 %v199
      %v348 = vunpack.c.h.b16 %v199
      %v349 = vunpack.c.l.b16 %v200
      %v350 = vunpack.c.h.b16 %v200
      %v351 = vunpack.c.l.b16 %v201
      %v352 = vunpack.c.h.b16 %v201
      %v353 = vunpack.c.l.b16 %v202
      %v354 = vunpack.c.h.b16 %v202
      %v355 = vunpack.c.l.b16 %v203
      %v356 = vunpack.c.h.b16 %v203
      %v357 = vunpack.c.l.b16 %v204
      %v358 = vunpack.c.h.b16 %v204
      %v359 = vunpack.c.l.b16 %v205
      %v360 = vunpack.c.h.b16 %v205
      %v361 = vunpack.c.l.b16 %v206
      %v362 = vunpack.c.h.b16 %v206
      %v363 = vunpack.c.l.b16 %v207
      %v364 = vunpack.c.h.b16 %v207
      %v365 = vunpack.c.l.b16 %v208
      %v366 = vunpack.c.h.b16 %v208
      %v367 = vunpack.c.l.b16 %v209
      %v368 = vunpack.c.h.b16 %v209
      %v369 = vunpack.c.l.b16 %v210
      %v370 = vunpack.c.h.b16 %v210
      %v371 = vunpack.c.l.b16 %v211
      %v372 = vunpack.c.h.b16 %v211
      %v373 = vunpack.c.l.b16 %v212
      %v374 = vunpack.c.h.b16 %v212
      %v375 = vunpack.c.l.b16 %v213
      %v376 = vunpack.c.h.b16 %v213
      %v377 = vunpack.c.l.b16 %v214
      %v378 = vunpack.c.h.b16 %v214
      %v379 = vunpack.c.l.b16 %v215
      %v380 = vunpack.c.h.b16 %v215
      %v381 = vunpack.c.l.b16 %v216
      %v382 = vunpack.c.h.b16 %v216
      %v383 = vunpack.c.l.b16 %v217
      %v384 = vunpack.c.h.b16 %v217
      %v385 = vunpack.c.l.b16 %v218
      %v386 = vunpack.c.h.b16 %v218
      %v387 = vunpack.c.l.b16 %v219
      %v388 = vunpack.c.h.b16 %v219
      %v389 = vunpack.c.l.b16 %v220
      %v390 = vunpack.c.h.b16 %v220
      %v391 = vunpack.c.l.b16 %v221
      %v392 = vunpack.c.h.b16 %v221
      %v393 = vunpack.c.l.b16 %v222
      %v394 = vunpack.c.h.b16 %v222
      %v395 = vunpack.c.l.b16 %v223
      %v396 = vunpack.c.h.b16 %v223
      %v397 = vunpack.c.l.b16 %v224
      %v398 = vunpack.c.h.b16 %v224
      %v399 = vunpack.c.l.b16 %v225
      %v400 = vunpack.c.h.b16 %v225
      %v401 = vunpack.c.l.b16 %v226
      %v402 = vunpack.c.h.b16 %v226
      %v403 = vunpack.c.l.b16 %v227
      %v404 = vunpack.c.h.b16 %v227
      %v405 = vunpack.c.l.b16 %v228
      %v406 = vunpack.c.h.b16 %v228
      %v407 = vunpack.c.l.b16 %v229
      %v408 = vunpack.c.h.b16 %v229
      %v409 = vunpack.c.l.b16 %v230
      %v410 = vunpack.c.h.b16 %v230
      %v411 = vunpack.c.l.b16 %v231
      %v412 = vunpack.c.h.b16 %v231
      %v413 = vunpack.c.l.b16 %v232
      %v414 = vunpack.c.h.b16 %v232
      %v415 = vunpack.c.l.b16 %v233
      %v416 = vunpack.c.h.b16 %v233
      %v417 = vunpack.c.l.b16 %v234
      %v418 = vunpack.c.h.b16 %v234
      %v419 = vunpack.c.l.b16 %v235
      %v420 = vunpack.c.h.b16 %v235
      %v421 = vunpack.c.l.b16 %v236
      %v422 = vunpack.c.h.b16 %v236
      %v423 = vunpack.c.l.b16 %v237
      %v424 = vunpack.c.h.b16 %v237
      %v425 = vunpack.c.l.b16 %v238
      %v426 = vunpack.c.h.b16 %v238
      %v427 = vunpack.c.l.b16 %v239
      %v428 = vunpack.c.h.b16 %v239
      %v429 = vunpack.c.l.b16 %v240
      %v430 = vunpack.c.h.b16 %v240
      %v431 = vunpack.c.l.b16 %v241
      %v432 = vunpack.c.h.b16 %v241
      %v433 = vunpack.c.l.b16 %v242
      %v434 = vunpack.c.h.b16 %v242
      %v435 = vunpack.c.l.b16 %v243
      %v436 = vunpack.c.h.b16 %v243
      %v437 = vunpack.c.l.b16 %v244
      %v438 = vunpack.c.h.b16 %v244
      %v439 = vunpack.c.l.b16 %v245
      %v440 = vunpack.c.h.b16 %v245
      %v441 = vunpack.c.l.b16 %v246
      %v442 = vunpack.c.h.b16 %v246
      %v443 = vunpack.c.l.b16 %v247
      %v444 = vunpack.c.h.b16 %v247
      %v445 = vunpack.c.l.b16 %v248
      %v446 = vunpack.c.h.b16 %v248
      %v447 = vunpack.c.l.b16 %v249
      %v448 = vunpack.c.h.b16 %v249
      %v449 = vunpack.c.l.b16 %v250
      %v450 = vunpack.c.h.b16 %v250
      %v451 = vunpack.c.l.b16 %v251
      %v452 = vunpack.c.h.b16 %v251
      %v453 = vunpack.c.l.b16 %v252
      %v454 = vunpack.c.h.b16 %v252
      %v455 = vunpack.c.l.b16 %v253
      %v456 = vunpack.c.h.b16 %v253
      %v457 = vunpack.c.l.b16 %v254
      %v458 = vunpack.c.h.b16 %v254
      %v459 = vunpack.c.l.b16 %v255
      %v460 = vunpack.c.h.b16 %v255
      %v461 = vunpack.c.l.b16 %v256
      %v462 = vunpack.c.h.b16 %v256
      %v463 = vpack.c.b16 %v337, %v335
      %v464 = vpack.c.b16 %v338, %v336
      %v465 = vpack.c.b16 %v341, %v339
      %v466 = vpack.c.b16 %v342, %v340
      %v467 = vpack.c.b16 %v345, %v343
      %v468 = vpack.c.b16 %v346, %v344
      %v469 = vpack.c.b16 %v349, %v347
      %v470 = vpack.c.b16 %v350, %v348
      %v471 = vpack.c.b16 %v353, %v351
      %v472 = vpack.c.b16 %v354, %v352
      %v473 = vpack.c.b16 %v357, %v355
      %v474 = vpack.c.b16 %v358, %v356
      %v475 = vpack.c.b16 %v361, %v359
      %v476 = vpack.c.b16 %v362, %v360
      %v477 = vpack.c.b16 %v365, %v363
      %v478 = vpack.c.b16 %v366, %v364
      %v479 = vpack.c.b16 %v369, %v367
      %v480 = vpack.c.b16 %v370, %v368
      %v481 = vpack.c.b16 %v373, %v371
      %v482 = vpack.c.b16 %v374, %v372
      %v483 = vpack.c.b16 %v377, %v375
      %v484 = vpack.c.b16 %v378, %v376
      %v485 = vpack.c.b16 %v381, %v379
      %v486 = vpack.c.b16 %v382, %v380
      %v487 = vpack.c.b16 %v385, %v383
      %v488 = vpack.c.b16 %v386, %v384
      %v489 = vpack.c.b16 %v389, %v387
      %v490 = vpack.c.b16 %v390, %v388
      %v491 = vpack.c.b16 %v393, %v391
      %v492 = vpack.c.b16 %v394, %v392
      %v493 = vpack.c.b16 %v397, %v395
      %v494 = vpack.c.b16 %v398, %v396
      %v495 = vpack.c.b16 %v401, %v399
      %v496 = vpack.c.b16 %v402, %v400
      %v497 = vpack.c.b16 %v405, %v403
      %v498 = vpack.c.b16 %v406, %v404
      %v499 = vpack.c.b16 %v409, %v407
      %v500 = vpack.c.b16 %v410, %v408
      %v501 = vpack.c.b16 %v413, %v411
      %v502 = vpack.c.b16 %v414, %v412
      %v503 = vpack.c.b16 %v417, %v415
      %v504 = vpack.c.b16 %v418, %v416
      %v505 = vpack.c.b16 %v421, %v419
      %v506 = vpack.c.b16 %v422, %v420
      %v507 = vpack.c.b16 %v425, %v423
      %v508 = vpack.c.b16 %v426, %v424
      %v509 = vpack.c.b16 %v429, %v427
      %v510 = vpack.c.b16 %v430, %v428
      %v511 = vpack.c.b16 %v433, %v431
      %v512 = vpack.c.b16 %v434, %v432
      %v513 = vpack.c.b16 %v437, %v435
      %v514 = vpack.c.b16 %v438, %v436
      %v515 = vpack.c.b16 %v441, %v439
      %v516 = vpack.c.b16 %v442, %v440
      %v517 = vpack.c.b16 %v445, %v443
      %v518 = vpack.c.b16 %v446, %v444
      %v519 = vpack.c.b16 %v449, %v447
      %v520 = vpack.c.b16 %v450, %v448
      %v521 = vpack.c.b16 %v453, %v451
      %v522 = vpack.c.b16 %v454, %v452
      %v523 = vpack.c.b16 %v457, %v455
      %v524 = vpack.c.b16 %v458, %v456
      %v525 = vpack.c.b16 %v461, %v459
      %v526 = vpack.c.b16 %v462, %v460
      %591 = vmatprep.subr.bf16.mxu0 %v478
      %592 = vmatpush1.bf16.msra.mxu0 %v477
      %593 = vmatprep.subr.bf16.mxu0 %v476
      %594 = vmatpush1.bf16.msra.mxu0 %v475
      %595 = vmatprep.subr.bf16.mxu0 %v474
      %596 = vmatpush1.bf16.msra.mxu0 %v473
      %597 = vmatprep.subr.bf16.mxu0 %v472
      %598 = vmatpush1.bf16.msra.mxu0 %v471
      %599 = vmatprep.subr.bf16.mxu0 %v470
      %600 = vmatpush1.bf16.msra.mxu0 %v469
      %601 = vmatprep.subr.bf16.mxu0 %v468
      %602 = vmatpush1.bf16.msra.mxu0 %v467
      %603 = vmatprep.subr.bf16.mxu0 %v466
      %604 = vmatpush1.bf16.msra.mxu0 %v465
      %605 = vmatprep.subr.bf16.mxu0 %v464
      %606 = vmatpush1.bf16.msra.mxu0 %v463
      %607 = vmatprep.subr.bf16.mxu0 %v494
      %608 = vmatpush2.bf16.msra.mxu0 %v493
      %609 = vmatprep.subr.bf16.mxu0 %v492
      %610 = vmatpush2.bf16.msra.mxu0 %v491
      %611 = vmatprep.subr.bf16.mxu0 %v490
      %612 = vmatpush2.bf16.msra.mxu0 %v489
      %613 = vmatprep.subr.bf16.mxu0 %v488
      %614 = vmatpush2.bf16.msra.mxu0 %v487
      %615 = vmatprep.subr.bf16.mxu0 %v486
      %616 = vmatpush2.bf16.msra.mxu0 %v485
      %617 = vmatprep.subr.bf16.mxu0 %v484
      %618 = vmatpush2.bf16.msra.mxu0 %v483
      %619 = vmatprep.subr.bf16.mxu0 %v482
      %620 = vmatpush2.bf16.msra.mxu0 %v481
      %621 = vmatprep.subr.bf16.mxu0 %v480
      %622 = vmatpush2.bf16.msra.mxu0 %v479
      %623 = vmatprep.mubr.bf16.mxu0 %v264
      %624 = vmatmul.mubr.bf16.gmra.mxu0 %v263
      %v625 = vpop.f32.mrf.mxu0
      %v626 = vadd.f32 0.0, %v625
      %v627 = vpop.f32.mrf.mxu0
      %v628 = vadd.f32 0.0, %v627
      %v629 = vpop.f32.mrf.mxu0
      %v630 = vpop.f32.mrf.mxu0
      %631 = vdwg.mxu0
      %632 = vmatprep.subr.bf16.mxu0 %v510
      %633 = vmatpush1.bf16.msra.mxu0 %v509
      %634 = vmatprep.subr.bf16.mxu0 %v508
      %635 = vmatpush1.bf16.msra.mxu0 %v507
      %636 = vmatprep.subr.bf16.mxu0 %v506
      %637 = vmatpush1.bf16.msra.mxu0 %v505
      %638 = vmatprep.subr.bf16.mxu0 %v504
      %639 = vmatpush1.bf16.msra.mxu0 %v503
      %640 = vmatprep.subr.bf16.mxu0 %v502
      %641 = vmatpush1.bf16.msra.mxu0 %v501
      %642 = vmatprep.subr.bf16.mxu0 %v500
      %643 = vmatpush1.bf16.msra.mxu0 %v499
      %644 = vmatprep.subr.bf16.mxu0 %v498
      %645 = vmatpush1.bf16.msra.mxu0 %v497
      %646 = vmatprep.subr.bf16.mxu0 %v496
      %647 = vmatpush1.bf16.msra.mxu0 %v495
      %648 = vmatprep.subr.bf16.mxu0 %v526
      %649 = vmatpush2.bf16.msra.mxu0 %v525
      %650 = vmatprep.subr.bf16.mxu0 %v524
      %651 = vmatpush2.bf16.msra.mxu0 %v523
      %652 = vmatprep.subr.bf16.mxu0 %v522
      %653 = vmatpush2.bf16.msra.mxu0 %v521
      %654 = vmatprep.subr.bf16.mxu0 %v520
      %655 = vmatpush2.bf16.msra.mxu0 %v519
      %656 = vmatprep.subr.bf16.mxu0 %v518
      %657 = vmatpush2.bf16.msra.mxu0 %v517
      %658 = vmatprep.subr.bf16.mxu0 %v516
      %659 = vmatpush2.bf16.msra.mxu0 %v515
      %660 = vmatprep.subr.bf16.mxu0 %v514
      %661 = vmatpush2.bf16.msra.mxu0 %v513
      %662 = vmatprep.subr.bf16.mxu0 %v512
      %663 = vmatpush2.bf16.msra.mxu0 %v511
      %664 = vmatprep.mubr.bf16.mxu0 %v266
      %665 = vmatmul.mubr.bf16.gmra.mxu0 %v265
      %v666 = vpop.f32.mrf.mxu0
      %v667 = vadd.f32 %v626, %v666
      %v668 = vpop.f32.mrf.mxu0
      %v669 = vadd.f32 %v628, %v668
      %v670 = vpop.f32.mrf.mxu0
      %v671 = vpop.f32.mrf.mxu0
      %672 = vdwg.mxu0
      %v673 = vadd.f32 %v189, %v667
      %v674 = vadd.f32 %v190, %v669
      %675 = vst [vmem:[%s3] sm:$0xff] %v673
      %676 = vst [vmem:[%s3 + $0x8] sm:$0xff] %v674
      %p677 = scmp.eq.s32.totalorder %s14, 1
      // Predicated region
      $region37: #{autoencoder_forward.2} parent=31 // pred_check
        %p678 = pneg %p677
      $region38: #{autoencoder_forward.2} parent=31 // pred_check_branch
        %680 = sbr.rel (%p678) target = $region40
      $region39: #{autoencoder_forward.2} parent=31 // pred_region
        %v681 = vld [vmem:[%s3] sm:$0xff]
        %v682 = vld [vmem:[%s3 + $0x8] sm:$0xff]
        %v683 = vld [vmem:[%s2] sm:$0x3]
        %v685 = vlaneseq
        %v686 = vshrl.u32 %v685, 7
        %v687 = vsub.s32 0, %v686
        %v688 = vrot.slane %v683, %v687
        %v689 = vlaneseq
        %v690 = vshrl.u32 %v689, 7
        %v691 = vsub.s32 1, %v690
        %v692 = vrot.slane %v683, %v691
        %v695 = vadd.f32 %v681, %v688
        %v696 = vadd.f32 %v682, %v692
        %v697 = vmax.f32 %v695, 0.0
        %v698 = vmax.f32 %v696, 0.0
        %699 = vst [vmem:[%s3] sm:$0xff] %v697
        %700 = vst [vmem:[%s3 + $0x8] sm:$0xff] %v698
      $region40: #{autoencoder_forward.2} parent=31 // pred_fallthru
        _
      // Predicated region
      $region41: #{autoencoder_forward.2} parent=31 // pred_check
        %p701 = pneg %p100
      $region42: #{autoencoder_forward.2} parent=31 // pred_check_branch
        %703 = sbr.rel (%p701) target = $region44
      $region43: #{autoencoder_forward.2} parent=31 // pred_region
        _
      $region44: #{autoencoder_forward.2} parent=31 // pred_fallthru
        _
      // Predicated region
      $region45: #{autoencoder_forward.2} parent=31 // pred_check
        %p704 = pneg %p100
      $region46: #{autoencoder_forward.2} parent=31 // pred_check_branch
        %706 = sbr.rel (%p704) target = $region48
      $region47: #{autoencoder_forward.2} parent=31 // pred_region
        _
      $region48: #{autoencoder_forward.2} parent=31 // pred_fallthru
        _
    $region32: #{autoencoder_forward.2} parent=5 // pred_fallthru
      _
    %p707 = scmp.le.s32.totalorder 2, %s9
    // Predicated region
    $region49: #{autoencoder_forward.2} parent=5 // pred_check
      %p708 = pneg %p707
    $region50: #{autoencoder_forward.2} parent=5 // pred_check_branch
      %710 = sbr.rel (%p708) target = $region52
    $region51: #{autoencoder_forward.2} parent=5 // pred_region
      %s711 = ssub.s32 %s9, 2
    $region52: #{autoencoder_forward.2} parent=5 // pred_fallthru
      _
  $region6: #{autoencoder_forward.2} parent=0 // loop_footer
    %s13 = sadd.s32 1, %s9
  $region7: #{autoencoder_forward.2} parent=0 // loop_footer_branch
    %8 = sbr.rel target = $region3
  $region8: #{autoencoder_forward.2} parent=0 // loop_exit
    _

// kernel: autoencoder_forward.3
$region0: #{autoencoder_forward.3}
  #allocation0 [shape = 'u32[]', space=smem, size = 0x4, offset = 0x4, fixed_abs, tag = 'smem constant byte address 0x4 - core index']
  #allocation1 [shape = 'u32[144,128]{1,0:T(1,128)}', space=vmem, size = 0x12000, scoped, tag = 'internal scratch']
  %s0 = inlined_call_operand.vmem [shape: bf16[8,256], index: 0, kind: input, shape index: {}]
  %s1 = inlined_call_operand.vmem [shape: bf16[256,1024], index: 1, kind: input, shape index: {}]
  %s2 = inlined_call_operand.vmem [shape: f32[1,1024], index: 2, kind: input, shape index: {}]
  %s3 = inlined_call_operand.vmem [shape: f32[8,1024], index: 3, kind: output, shape index: {}]
  %s4 = sld [smem:[#allocation0]]
  $region68: #{autoencoder_forward.3} parent=0
    _
  %s6 = ssub.s32 1, %s4
  %s7 = scalar_select 0, %s6, %s4
  $region1: #{autoencoder_forward.3} parent=0
    #allocation2 [shape = 'u8[524288]{0}', space=vmem, size = 0x80000, scoped, tag = 'input window, operand 1']
    loop: start=0, step=1, limit=4
    $region2: #{autoencoder_forward.3} parent=1 // loop_pre_header
      _
    $region3: #{autoencoder_forward.3} parent=1 // loop_header
      %s9 = sphi 0, %s13
      %p10 = scmp.ge.s32.totalorder %s9, 4
      %s17 = sphi 0, %s17
      %s19 = sphi 0, %s17
      %s20 = sphi 0, %s19
      %s34 = sphi 0, %s20
      %s40 = sphi 0, %s42
      %s43 = sphi 0, %s40
      %s44 = sphi 0, %s43
      %s60 = sphi 0, %s44
      %s66 = sphi 0, %s68
      %s69 = sphi 0, %s66
      %s70 = sphi 0, %s69
      %s86 = sphi 0, %s70
      %s92 = sphi 0, %s94
      %s95 = sphi 0, %s92
      %s96 = sphi 0, %s95
      %s112 = sphi 0, %s96
    $region4: #{autoencoder_forward.3} parent=1 // loop_header_branch
      %12 = sbr.rel (%p10) target = $region8
    $region5: #{autoencoder_forward.3} parent=1 // loop_body
      %s14 = ssub.s32 %s9, 1
      %s15 = ssub.s32 %s9, 2
      %s16 = sadd.s32 %s9, 1
      %s18 = sadd.s32 %s17, 1
      %p21 = scmp.eq.s32.totalorder %s9, 1
      %p22 = scmp.ne.s32.totalorder %s17, %s19
      %p23 = scmp.eq.s32.totalorder %s9, 0
      %p24 = por %p22, %p23
      %p25 = scmp.ne.s32.totalorder %s17, %s19
      %p26 = scmp.eq.s32.totalorder %s14, 1
      %p27 = por %p25, %p26
      %p28 = scmp.ne.s32.totalorder %s19, %s20
      %p29 = scmp.eq.s32.totalorder %s14, 0
      %p30 = por %p28, %p29
      %p31 = scmp.ne.s32.totalorder %s19, %s20
      %p32 = scmp.eq.s32.totalorder %s15, 1
      %p33 = por %p31, %p32
      %p35 = scmp.ne.s32.totalorder %s20, %s34
      %p36 = scmp.eq.s32.totalorder %s15, 0
      %p37 = por %p35, %p36
      %s38 = ssub.s32 %s9, %s16
      %p39 = scmp.eq.s32.totalorder %s38, 0
      %s41 = sadd.s32 %s40, 1
      %s42 = scalar_select %p39, %s40, %s41
      %p45 = pneg %p39
      %p46 = scmp.eq.s32.totalorder %s9, 1
      %p47 = por %p45, %p46
      %p48 = scmp.ne.s32.totalorder %s40, %s43
      %p49 = scmp.eq.s32.totalorder %s9, 0
      %p50 = por %p48, %p49
      %p51 = scmp.ne.s32.totalorder %s40, %s43
      %p52 = scmp.eq.s32.totalorder %s14, 1
      %p53 = por %p51, %p52
      %p54 = scmp.ne.s32.totalorder %s43, %s44
      %p55 = scmp.eq.s32.totalorder %s14, 0
      %p56 = por %p54, %p55
      %p57 = scmp.ne.s32.totalorder %s43, %s44
      %p58 = scmp.eq.s32.totalorder %s15, 1
      %p59 = por %p57, %p58
      %p61 = scmp.ne.s32.totalorder %s44, %s60
      %p62 = scmp.eq.s32.totalorder %s15, 0
      %p63 = por %p61, %p62
      %s64 = ssub.s32 %s9, %s16
      %p65 = scmp.eq.s32.totalorder %s64, 0
      %s67 = sadd.s32 %s66, 1
      %s68 = scalar_select %p65, %s66, %s67
      %p71 = pneg %p65
      %p72 = scmp.eq.s32.totalorder %s9, 1
      %p73 = por %p71, %p72
      %p74 = scmp.ne.s32.totalorder %s66, %s69
      %p75 = scmp.eq.s32.totalorder %s9, 0
      %p76 = por %p74, %p75
      %p77 = scmp.ne.s32.totalorder %s66, %s69
      %p78 = scmp.eq.s32.totalorder %s14, 1
      %p79 = por %p77, %p78
      %p80 = scmp.ne.s32.totalorder %s69, %s70
      %p81 = scmp.eq.s32.totalorder %s14, 0
      %p82 = por %p80, %p81
      %p83 = scmp.ne.s32.totalorder %s69, %s70
      %p84 = scmp.eq.s32.totalorder %s15, 1
      %p85 = por %p83, %p84
      %p87 = scmp.ne.s32.totalorder %s70, %s86
      %p88 = scmp.eq.s32.totalorder %s15, 0
      %p89 = por %p87, %p88
      %s90 = ssub.s32 %s9, %s16
      %p91 = scmp.eq.s32.totalorder %s90, 0
      %s93 = sadd.s32 %s92, 1
      %s94 = scalar_select %p91, %s92, %s93
      %p97 = pneg %p91
      %p98 = scmp.eq.s32.totalorder %s9, 1
      %p99 = por %p97, %p98
      %p100 = scmp.ne.s32.totalorder %s92, %s95
      %p101 = scmp.eq.s32.totalorder %s9, 0
      %p102 = por %p100, %p101
      %p103 = scmp.ne.s32.totalorder %s92, %s95
      %p104 = scmp.eq.s32.totalorder %s14, 1
      %p105 = por %p103, %p104
      %p106 = scmp.ne.s32.totalorder %s95, %s96
      %p107 = scmp.eq.s32.totalorder %s14, 0
      %p108 = por %p106, %p107
      %p109 = scmp.ne.s32.totalorder %s95, %s96
      %p110 = scmp.eq.s32.totalorder %s15, 1
      %p111 = por %p109, %p110
      %p113 = scmp.ne.s32.totalorder %s96, %s112
      %p114 = scmp.eq.s32.totalorder %s15, 0
      %p115 = por %p113, %p114
      %p116 = scmp.le.s32.totalorder 1, %s9
      %p117 = scmp.lt.s32.totalorder %s9, 3
      %p118 = pnand %p116, %p117
      %p119 = pneg %p118
      // Predicated region
      $region9: #{autoencoder_forward.3} parent=5 // pred_check
        _
      $region10: #{autoencoder_forward.3} parent=5 // pred_check_branch
        %121 = sbr.rel (%p118) target = $region12
      $region11: #{autoencoder_forward.3} parent=5 // pred_region
        %s122 = ssub.s32 %s9, 1
        // Predicated region
        $region13: #{autoencoder_forward.3} parent=11 // pred_check
          %p123 = pneg %p30
        $region14: #{autoencoder_forward.3} parent=11 // pred_check_branch
          %125 = sbr.rel (%p123) target = $region16
        $region15: #{autoencoder_forward.3} parent=11 // pred_region
          _
        $region16: #{autoencoder_forward.3} parent=11 // pred_fallthru
          _
      $region12: #{autoencoder_forward.3} parent=5 // pred_fallthru
        _
      %p126 = scmp.lt.s32.totalorder %s9, 2
      // Predicated region
      $region17: #{autoencoder_forward.3} parent=5 // pred_check
        %p127 = pneg %p126
      $region18: #{autoencoder_forward.3} parent=5 // pred_check_branch
        %129 = sbr.rel (%p127) target = $region20
      $region19: #{autoencoder_forward.3} parent=5 // pred_region
        // Predicated region
        $region21: #{autoencoder_forward.3} parent=19 // pred_check
          %p130 = pneg %p50
        $region22: #{autoencoder_forward.3} parent=19 // pred_check_branch
          %132 = sbr.rel (%p130) target = $region24
        $region23: #{autoencoder_forward.3} parent=19 // pred_region
          %s133 = sand.u32 %s40, 1
          %s134 = sand.u32 %s40, 1
          %s135 = smul.addr %s134, 512
          %s136 = scalar_lea.vmem [#allocation2], %s135
          %s137 = smul.u32 4, %s9
          %s138 = smul.addr %s137, 4
          %s139 = scalar_lea.vmem %s1, %s138
          // Predicated region
          $region25: #{autoencoder_forward.3} parent=23 // pred_check
            _
          $region26: #{autoencoder_forward.3} parent=23 // pred_check_branch
            %141 = sbr.rel (0) target = $region28
          $region27: #{autoencoder_forward.3} parent=23 // pred_region
            // Predicated region
            $region29: #{autoencoder_forward.3} parent=27 // pred_check
              _
            $region30: #{autoencoder_forward.3} parent=27 // pred_check_branch
              %143 = sbr.rel (0) target = $region32
            $region31: #{autoencoder_forward.3} parent=27 // pred_region
              loop: start=0, step=1, limit=1
              $region33: #{autoencoder_forward.3} parent=31 // loop_pre_header
                _
              $region34: #{autoencoder_forward.3} parent=31 // loop_header
                %s145 = sphi 0, %s149
                %p146 = scmp.ge.s32.totalorder %s145, 1
                %s150 = sphi %s139, %s139
                %s151 = sphi %s136, %s136
              $region35: #{autoencoder_forward.3} parent=31 // loop_header_branch
                %148 = sbr.rel (%p146) target = $region39
              $region36: #{autoencoder_forward.3} parent=31 // loop_body
                %v152 = vld [vmem:[%s150] sm:$0xff]
                %153 = vst [vmem:[%s151] sm:$0xff] %v152
                %v154 = vld [vmem:[%s150 + $0x8] sm:$0xff]
                %155 = vst [vmem:[%s151 + $0x8] sm:$0xff] %v154
                %v156 = vld [vmem:[%s150 + $0x20] sm:$0xff]
                %157 = vst [vmem:[%s151 + $0x10] sm:$0xff] %v156
                %v158 = vld [vmem:[%s150 + $0x28] sm:$0xff]
                %159 = vst [vmem:[%s151 + $0x18] sm:$0xff] %v158
                %v160 = vld [vmem:[%s150 + $0x40] sm:$0xff]
                %161 = vst [vmem:[%s151 + $0x20] sm:$0xff] %v160
                %v162 = vld [vmem:[%s150 + $0x48] sm:$0xff]
                %163 = vst [vmem:[%s151 + $0x28] sm:$0xff] %v162
                %v164 = vld [vmem:[%s150 + $0x60] sm:$0xff]
                %165 = vst [vmem:[%s151 + $0x30] sm:$0xff] %v164
                %v166 = vld [vmem:[%s150 + $0x68] sm:$0xff]
                %167 = vst [vmem:[%s151 + $0x38] sm:$0xff] %v166
                %v168 = vld [vmem:[%s150 + $0x80] sm:$0xff]
                %169 = vst [vmem:[%s151 + $0x40] sm:$0xff] %v168
                %v170 = vld [vmem:[%s150 + $0x88] sm:$0xff]
                %171 = vst [vmem:[%s151 + $0x48] sm:$0xff] %v170
                %v172 = vld [vmem:[%s150 + $0xa0] sm:$0xff]
                %173 = vst [vmem:[%s151 + $0x50] sm:$0xff] %v172
                %v174 = vld [vmem:[%s150 + $0xa8] sm:$0xff]
                %175 = vst [vmem:[%s151 + $0x58] sm:$0xff] %v174
                %v176 = vld [vmem:[%s150 + $0xc0] sm:$0xff]
                %177 = vst [vmem:[%s151 + $0x60] sm:$0xff] %v176
                %v178 = vld [vmem:[%s150 + $0xc8] sm:$0xff]
                %179 = vst [vmem:[%s151 + $0x68] sm:$0xff] %v178
                %v180 = vld [vmem:[%s150 + $0xe0] sm:$0xff]
                %181 = vst [vmem:[%s151 + $0x70] sm:$0xff] %v180
                %v182 = vld [vmem:[%s150 + $0xe8] sm:$0xff]
                %183 = vst [vmem:[%s151 + $0x78] sm:$0xff] %v182
                %v184 = vld [vmem:[%s150 + $0x100] sm:$0xff]
                %185 = vst [vmem:[%s151 + $0x80] sm:$0xff] %v184
                %v186 = vld [vmem:[%s150 + $0x108] sm:$0xff]
                %187 = vst [vmem:[%s151 + $0x88] sm:$0xff] %v186
                %v188 = vld [vmem:[%s150 + $0x120] sm:$0xff]
                %189 = vst [vmem:[%s151 + $0x90] sm:$0xff] %v188
                %v190 = vld [vmem:[%s150 + $0x128] sm:$0xff]
                %191 = vst [vmem:[%s151 + $0x98] sm:$0xff] %v190
                %v192 = vld [vmem:[%s150 + $0x140] sm:$0xff]
                %193 = vst [vmem:[%s151 + $0xa0] sm:$0xff] %v192
                %v194 = vld [vmem:[%s150 + $0x148] sm:$0xff]
                %195 = vst [vmem:[%s151 + $0xa8] sm:$0xff] %v194
                %v196 = vld [vmem:[%s150 + $0x160] sm:$0xff]
                %197 = vst [vmem:[%s151 + $0xb0] sm:$0xff] %v196
                %v198 = vld [vmem:[%s150 + $0x168] sm:$0xff]
                %199 = vst [vmem:[%s151 + $0xb8] sm:$0xff] %v198
                %v200 = vld [vmem:[%s150 + $0x180] sm:$0xff]
                %201 = vst [vmem:[%s151 + $0xc0] sm:$0xff] %v200
                %v202 = vld [vmem:[%s150 + $0x188] sm:$0xff]
                %203 = vst [vmem:[%s151 + $0xc8] sm:$0xff] %v202
                %v204 = vld [vmem:[%s150 + $0x1a0] sm:$0xff]
                %205 = vst [vmem:[%s151 + $0xd0] sm:$0xff] %v204
                %v206 = vld [vmem:[%s150 + $0x1a8] sm:$0xff]
                %207 = vst [vmem:[%s151 + $0xd8] sm:$0xff] %v206
                %v208 = vld [vmem:[%s150 + $0x1c0] sm:$0xff]
                %209 = vst [vmem:[%s151 + $0xe0] sm:$0xff] %v208
                %v210 = vld [vmem:[%s150 + $0x1c8] sm:$0xff]
                %211 = vst [vmem:[%s151 + $0xe8] sm:$0xff] %v210
                %v212 = vld [vmem:[%s150 + $0x1e0] sm:$0xff]
                %213 = vst [vmem:[%s151 + $0xf0] sm:$0xff] %v212
                %v214 = vld [vmem:[%s150 + $0x1e8] sm:$0xff]
                %215 = vst [vmem:[%s151 + $0xf8] sm:$0xff] %v214
                %v216 = vld [vmem:[%s150 + $0x200] sm:$0xff]
                %217 = vst [vmem:[%s151 + $0x100] sm:$0xff] %v216
                %v218 = vld [vmem:[%s150 + $0x208] sm:$0xff]
                %219 = vst [vmem:[%s151 + $0x108] sm:$0xff] %v218
                %v220 = vld [vmem:[%s150 + $0x220] sm:$0xff]
                %221 = vst [vmem:[%s151 + $0x110] sm:$0xff] %v220
                %v222 = vld [vmem:[%s150 + $0x228] sm:$0xff]
                %223 = vst [vmem:[%s151 + $0x118] sm:$0xff] %v222
                %v224 = vld [vmem:[%s150 + $0x240] sm:$0xff]
                %225 = vst [vmem:[%s151 + $0x120] sm:$0xff] %v224
                %v226 = vld [vmem:[%s150 + $0x248] sm:$0xff]
                %227 = vst [vmem:[%s151 + $0x128] sm:$0xff] %v226
                %v228 = vld [vmem:[%s150 + $0x260] sm:$0xff]
                %229 = vst [vmem:[%s151 + $0x130] sm:$0xff] %v228
                %v230 = vld [vmem:[%s150 + $0x268] sm:$0xff]
                %231 = vst [vmem:[%s151 + $0x138] sm:$0xff] %v230
                %v232 = vld [vmem:[%s150 + $0x280] sm:$0xff]
                %233 = vst [vmem:[%s151 + $0x140] sm:$0xff] %v232
                %v234 = vld [vmem:[%s150 + $0x288] sm:$0xff]
                %235 = vst [vmem:[%s151 + $0x148] sm:$0xff] %v234
                %v236 = vld [vmem:[%s150 + $0x2a0] sm:$0xff]
                %237 = vst [vmem:[%s151 + $0x150] sm:$0xff] %v236
                %v238 = vld [vmem:[%s150 + $0x2a8] sm:$0xff]
                %239 = vst [vmem:[%s151 + $0x158] sm:$0xff] %v238
                %v240 = vld [vmem:[%s150 + $0x2c0] sm:$0xff]
                %241 = vst [vmem:[%s151 + $0x160] sm:$0xff] %v240
                %v242 = vld [vmem:[%s150 + $0x2c8] sm:$0xff]
                %243 = vst [vmem:[%s151 + $0x168] sm:$0xff] %v242
                %v244 = vld [vmem:[%s150 + $0x2e0] sm:$0xff]
                %245 = vst [vmem:[%s151 + $0x170] sm:$0xff] %v244
                %v246 = vld [vmem:[%s150 + $0x2e8] sm:$0xff]
                %247 = vst [vmem:[%s151 + $0x178] sm:$0xff] %v246
                %v248 = vld [vmem:[%s150 + $0x300] sm:$0xff]
                %249 = vst [vmem:[%s151 + $0x180] sm:$0xff] %v248
                %v250 = vld [vmem:[%s150 + $0x308] sm:$0xff]
                %251 = vst [vmem:[%s151 + $0x188] sm:$0xff] %v250
                %v252 = vld [vmem:[%s150 + $0x320] sm:$0xff]
                %253 = vst [vmem:[%s151 + $0x190] sm:$0xff] %v252
                %v254 = vld [vmem:[%s150 + $0x328] sm:$0xff]
                %255 = vst [vmem:[%s151 + $0x198] sm:$0xff] %v254
                %v256 = vld [vmem:[%s150 + $0x340] sm:$0xff]
                %257 = vst [vmem:[%s151 + $0x1a0] sm:$0xff] %v256
                %v258 = vld [vmem:[%s150 + $0x348] sm:$0xff]
                %259 = vst [vmem:[%s151 + $0x1a8] sm:$0xff] %v258
                %v260 = vld [vmem:[%s150 + $0x360] sm:$0xff]
                %261 = vst [vmem:[%s151 + $0x1b0] sm:$0xff] %v260
                %v262 = vld [vmem:[%s150 + $0x368] sm:$0xff]
                %263 = vst [vmem:[%s151 + $0x1b8] sm:$0xff] %v262
                %v264 = vld [vmem:[%s150 + $0x380] sm:$0xff]
                %265 = vst [vmem:[%s151 + $0x1c0] sm:$0xff] %v264
                %v266 = vld [vmem:[%s150 + $0x388] sm:$0xff]
                %267 = vst [vmem:[%s151 + $0x1c8] sm:$0xff] %v266
                %v268 = vld [vmem:[%s150 + $0x3a0] sm:$0xff]
                %269 = vst [vmem:[%s151 + $0x1d0] sm:$0xff] %v268
                %v270 = vld [vmem:[%s150 + $0x3a8] sm:$0xff]
                %271 = vst [vmem:[%s151 + $0x1d8] sm:$0xff] %v270
                %v272 = vld [vmem:[%s150 + $0x3c0] sm:$0xff]
                %273 = vst [vmem:[%s151 + $0x1e0] sm:$0xff] %v272
                %v274 = vld [vmem:[%s150 + $0x3c8] sm:$0xff]
                %275 = vst [vmem:[%s151 + $0x1e8] sm:$0xff] %v274
                %v276 = vld [vmem:[%s150 + $0x3e0] sm:$0xff]
                %277 = vst [vmem:[%s151 + $0x1f0] sm:$0xff] %v276
                %v278 = vld [vmem:[%s150 + $0x3e8] sm:$0xff]
                %279 = vst [vmem:[%s151 + $0x1f8] sm:$0xff] %v278
              $region37: #{autoencoder_forward.3} parent=31 // loop_footer
                %s149 = sadd.s32 1, %s145
              $region38: #{autoencoder_forward.3} parent=31 // loop_footer_branch
                %144 = sbr.rel target = $region34
              $region39: #{autoencoder_forward.3} parent=31 // loop_exit
                _
            $region32: #{autoencoder_forward.3} parent=27 // pred_fallthru
              _
            // Predicated region
            $region40: #{autoencoder_forward.3} parent=27 // pred_check
              _
            $region41: #{autoencoder_forward.3} parent=27 // pred_check_branch
              %281 = sbr.rel target = $region43
            $region42: #{autoencoder_forward.3} parent=27 // pred_region
              _
            $region43: #{autoencoder_forward.3} parent=27 // pred_fallthru
              _
          $region28: #{autoencoder_forward.3} parent=23 // pred_fallthru
            _
          %282 = vnop
        $region24: #{autoencoder_forward.3} parent=19 // pred_fallthru
          _
        // Predicated region
        $region44: #{autoencoder_forward.3} parent=19 // pred_check
          %p283 = pneg %p76
        $region45: #{autoencoder_forward.3} parent=19 // pred_check_branch
          %285 = sbr.rel (%p283) target = $region47
        $region46: #{autoencoder_forward.3} parent=19 // pred_region
          %s286 = smul.u32 4, %s9
          %p287 = scmp.lt.s32.totalorder %s286, 7
          %s288 = scalar_select %p287, %s286, 7
          %s289 = scalar_lea.vmem %s2, %s288
          %s290 = smul.u32 4, %s9
        $region47: #{autoencoder_forward.3} parent=19 // pred_fallthru
          _
      $region20: #{autoencoder_forward.3} parent=5 // pred_fallthru
        _
      %p291 = scmp.le.s32.totalorder 1, %s9
      %p292 = scmp.lt.s32.totalorder %s9, 3
      %p293 = pnand %p291, %p292
      %p294 = pneg %p293
      // Predicated region
      $region48: #{autoencoder_forward.3} parent=5 // pred_check
        _
      $region49: #{autoencoder_forward.3} parent=5 // pred_check_branch
        %296 = sbr.rel (%p293) target = $region51
      $region50: #{autoencoder_forward.3} parent=5 // pred_region
        %s297 = ssub.s32 %s9, 1
        %s298 = sand.u32 %s43, 1
        %s299 = sand.u32 %s43, 1
        %s300 = smul.addr %s299, 512
        %s301 = scalar_lea.vmem [#allocation2], %s300
        // Predicated region
        $region52: #{autoencoder_forward.3} parent=50 // pred_check
          %p302 = pneg %p56
        $region53: #{autoencoder_forward.3} parent=50 // pred_check_branch
          %304 = sbr.rel (%p302) target = $region55
        $region54: #{autoencoder_forward.3} parent=50 // pred_region
          _
        $region55: #{autoencoder_forward.3} parent=50 // pred_fallthru
          _
        %p305 = pneg %p30
        %p306 = pneg %p27
        %s307 = sand.u32 %s43, 1
        %s308 = sand.u32 %s43, 1
        %s309 = smul.addr %s308, 512
        %s310 = scalar_lea.vmem [#allocation2], %s309
        %p311 = pneg %p56
        %p312 = pneg %p53
        %s313 = smul.u32 4, %s14
        %p314 = scmp.lt.s32.totalorder %s313, 7
        %s315 = scalar_select %p314, %s313, 7
        %s316 = scalar_lea.vmem %s2, %s315
        %p317 = pneg %p82
        %p318 = pneg %p79
        %p319 = pneg %p108
        %p320 = pneg %p105
        %s321 = smul.u32 4, %s14
        %p322 = scmp.lt.s32.totalorder %s321, 7
        %s323 = scalar_select %p322, %s321, 7
        %s324 = smul.addr %s323, 8
        %s325 = scalar_lea.vmem %s3, %s324
        %s326 = smul.u32 4, %s14
        %s327 = smul.u32 4, %s14
        %p328 = scmp.lt.s32.totalorder %s327, 7
        %s329 = scalar_select %p328, %s327, 7
        %s330 = scalar_lea.vmem %s2, %s329
        %s331 = smul.u32 4, %s14
        %s332 = smul.u32 4, %s14
        %p333 = scmp.lt.s32.totalorder %s332, 7
        %s334 = scalar_select %p333, %s332, 7
        %s335 = smul.addr %s334, 8
        %s336 = scalar_lea.vmem %s3, %s335
        %s337 = smul.u32 4, %s14
        %v338 = vld [vmem:[%s0] sm:$0xff]
        %v339 = vld [vmem:[%s301] sm:$0xff]
        %v340 = vld [vmem:[%s301 + $0x8] sm:$0xff]
        %v341 = vld [vmem:[%s301 + $0x10] sm:$0xff]
        %v342 = vld [vmem:[%s301 + $0x18] sm:$0xff]
        %v343 = vld [vmem:[%s301 + $0x20] sm:$0xff]
        %v344 = vld [vmem:[%s301 + $0x28] sm:$0xff]
        %v345 = vld [vmem:[%s301 + $0x30] sm:$0xff]
        %v346 = vld [vmem:[%s301 + $0x38] sm:$0xff]
        %v347 = vld [vmem:[%s301 + $0x40] sm:$0xff]
        %v348 = vld [vmem:[%s301 + $0x48] sm:$0xff]
        %v349 = vld [vmem:[%s301 + $0x50] sm:$0xff]
        %v350 = vld [vmem:[%s301 + $0x58] sm:$0xff]
        %v351 = vld [vmem:[%s301 + $0x60] sm:$0xff]
        %v352 = vld [vmem:[%s301 + $0x68] sm:$0xff]
        %v353 = vld [vmem:[%s301 + $0x70] sm:$0xff]
        %v354 = vld [vmem:[%s301 + $0x78] sm:$0xff]
        %v355 = vld [vmem:[%s301 + $0x80] sm:$0xff]
        %v356 = vld [vmem:[%s301 + $0x88] sm:$0xff]
        %v357 = vld [vmem:[%s301 + $0x90] sm:$0xff]
        %v358 = vld [vmem:[%s301 + $0x98] sm:$0xff]
        %v359 = vld [vmem:[%s301 + $0xa0] sm:$0xff]
        %v360 = vld [vmem:[%s301 + $0xa8] sm:$0xff]
        %v361 = vld [vmem:[%s301 + $0xb0] sm:$0xff]
        %v362 = vld [vmem:[%s301 + $0xb8] sm:$0xff]
        %v363 = vld [vmem:[%s301 + $0xc0] sm:$0xff]
        %v364 = vld [vmem:[%s301 + $0xc8] sm:$0xff]
        %v365 = vld [vmem:[%s301 + $0xd0] sm:$0xff]
        %v366 = vld [vmem:[%s301 + $0xd8] sm:$0xff]
        %v367 = vld [vmem:[%s301 + $0xe0] sm:$0xff]
        %v368 = vld [vmem:[%s301 + $0xe8] sm:$0xff]
        %v369 = vld [vmem:[%s301 + $0xf0] sm:$0xff]
        %v370 = vld [vmem:[%s301 + $0xf8] sm:$0xff]
        %v371 = vld [vmem:[%s301 + $0x100] sm:$0xff]
        %v372 = vld [vmem:[%s301 + $0x108] sm:$0xff]
        %v373 = vld [vmem:[%s301 + $0x110] sm:$0xff]
        %v374 = vld [vmem:[%s301 + $0x118] sm:$0xff]
        %v375 = vld [vmem:[%s301 + $0x120] sm:$0xff]
        %v376 = vld [vmem:[%s301 + $0x128] sm:$0xff]
        %v377 = vld [vmem:[%s301 + $0x130] sm:$0xff]
        %v378 = vld [vmem:[%s301 + $0x138] sm:$0xff]
        %v379 = vld [vmem:[%s301 + $0x140] sm:$0xff]
        %v380 = vld [vmem:[%s301 + $0x148] sm:$0xff]
        %v381 = vld [vmem:[%s301 + $0x150] sm:$0xff]
        %v382 = vld [vmem:[%s301 + $0x158] sm:$0xff]
        %v383 = vld [vmem:[%s301 + $0x160] sm:$0xff]
        %v384 = vld [vmem:[%s301 + $0x168] sm:$0xff]
        %v385 = vld [vmem:[%s301 + $0x170] sm:$0xff]
        %v386 = vld [vmem:[%s301 + $0x178] sm:$0xff]
        %v387 = vld [vmem:[%s301 + $0x180] sm:$0xff]
        %v388 = vld [vmem:[%s301 + $0x188] sm:$0xff]
        %v389 = vld [vmem:[%s301 + $0x190] sm:$0xff]
        %v390 = vld [vmem:[%s301 + $0x198] sm:$0xff]
        %v391 = vld [vmem:[%s301 + $0x1a0] sm:$0xff]
        %v392 = vld [vmem:[%s301 + $0x1a8] sm:$0xff]
        %v393 = vld [vmem:[%s301 + $0x1b0] sm:$0xff]
        %v394 = vld [vmem:[%s301 + $0x1b8] sm:$0xff]
        %v395 = vld [vmem:[%s301 + $0x1c0] sm:$0xff]
        %v396 = vld [vmem:[%s301 + $0x1c8] sm:$0xff]
        %v397 = vld [vmem:[%s301 + $0x1d0] sm:$0xff]
        %v398 = vld [vmem:[%s301 + $0x1d8] sm:$0xff]
        %v399 = vld [vmem:[%s301 + $0x1e0] sm:$0xff]
        %v400 = vld [vmem:[%s301 + $0x1e8] sm:$0xff]
        %v401 = vld [vmem:[%s301 + $0x1f0] sm:$0xff]
        %v402 = vld [vmem:[%s301 + $0x1f8] sm:$0xff]
        %v403 = vld [vmem:[%s330] sm:$0xf]
        %v405 = vlaneseq
        %v406 = vshrl.u32 %v405, 7
        %v407 = vsub.s32 0, %v406
        %v408 = vrot.slane %v403, %v407
        %v409 = vlaneseq
        %v410 = vshrl.u32 %v409, 7
        %v411 = vsub.s32 1, %v410
        %v412 = vrot.slane %v403, %v411
        %v413 = vlaneseq
        %v414 = vshrl.u32 %v413, 7
        %v415 = vsub.s32 2, %v414
        %v416 = vrot.slane %v403, %v415
        %v417 = vlaneseq
        %v418 = vshrl.u32 %v417, 7
        %v419 = vsub.s32 3, %v418
        %v420 = vrot.slane %v403, %v419
        %v426 = vunpack.c.l.b16 %v338
        %v427 = vunpack.c.h.b16 %v338
        %v428 = vpack.c.b16 %v426, %v426
        %v429 = vpack.c.b16 %v427, %v427
        %v496 = vunpack.c.l.b16 %v339
        %v497 = vunpack.c.h.b16 %v339
        %v498 = vunpack.c.l.b16 %v340
        %v499 = vunpack.c.h.b16 %v340
        %v500 = vunpack.c.l.b16 %v341
        %v501 = vunpack.c.h.b16 %v341
        %v502 = vunpack.c.l.b16 %v342
        %v503 = vunpack.c.h.b16 %v342
        %v504 = vunpack.c.l.b16 %v343
        %v505 = vunpack.c.h.b16 %v343
        %v506 = vunpack.c.l.b16 %v344
        %v507 = vunpack.c.h.b16 %v344
        %v508 = vunpack.c.l.b16 %v345
        %v509 = vunpack.c.h.b16 %v345
        %v510 = vunpack.c.l.b16 %v346
        %v511 = vunpack.c.h.b16 %v346
        %v512 = vunpack.c.l.b16 %v347
        %v513 = vunpack.c.h.b16 %v347
        %v514 = vunpack.c.l.b16 %v348
        %v515 = vunpack.c.h.b16 %v348
        %v516 = vunpack.c.l.b16 %v349
        %v517 = vunpack.c.h.b16 %v349
        %v518 = vunpack.c.l.b16 %v350
        %v519 = vunpack.c.h.b16 %v350
        %v520 = vunpack.c.l.b16 %v351
        %v521 = vunpack.c.h.b16 %v351
        %v522 = vunpack.c.l.b16 %v352
        %v523 = vunpack.c.h.b16 %v352
        %v524 = vunpack.c.l.b16 %v353
        %v525 = vunpack.c.h.b16 %v353
        %v526 = vunpack.c.l.b16 %v354
        %v527 = vunpack.c.h.b16 %v354
        %v528 = vunpack.c.l.b16 %v355
        %v529 = vunpack.c.h.b16 %v355
        %v530 = vunpack.c.l.b16 %v356
        %v531 = vunpack.c.h.b16 %v356
        %v532 = vunpack.c.l.b16 %v357
        %v533 = vunpack.c.h.b16 %v357
        %v534 = vunpack.c.l.b16 %v358
        %v535 = vunpack.c.h.b16 %v358
        %v536 = vunpack.c.l.b16 %v359
        %v537 = vunpack.c.h.b16 %v359
        %v538 = vunpack.c.l.b16 %v360
        %v539 = vunpack.c.h.b16 %v360
        %v540 = vunpack.c.l.b16 %v361
        %v541 = vunpack.c.h.b16 %v361
        %v542 = vunpack.c.l.b16 %v362
        %v543 = vunpack.c.h.b16 %v362
        %v544 = vunpack.c.l.b16 %v363
        %v545 = vunpack.c.h.b16 %v363
        %v546 = vunpack.c.l.b16 %v364
        %v547 = vunpack.c.h.b16 %v364
        %v548 = vunpack.c.l.b16 %v365
        %v549 = vunpack.c.h.b16 %v365
        %v550 = vunpack.c.l.b16 %v366
        %v551 = vunpack.c.h.b16 %v366
        %v552 = vunpack.c.l.b16 %v367
        %v553 = vunpack.c.h.b16 %v367
        %v554 = vunpack.c.l.b16 %v368
        %v555 = vunpack.c.h.b16 %v368
        %v556 = vunpack.c.l.b16 %v369
        %v557 = vunpack.c.h.b16 %v369
        %v558 = vunpack.c.l.b16 %v370
        %v559 = vunpack.c.h.b16 %v370
        %v560 = vunpack.c.l.b16 %v371
        %v561 = vunpack.c.h.b16 %v371
        %v562 = vunpack.c.l.b16 %v372
        %v563 = vunpack.c.h.b16 %v372
        %v564 = vunpack.c.l.b16 %v373
        %v565 = vunpack.c.h.b16 %v373
        %v566 = vunpack.c.l.b16 %v374
        %v567 = vunpack.c.h.b16 %v374
        %v568 = vunpack.c.l.b16 %v375
        %v569 = vunpack.c.h.b16 %v375
        %v570 = vunpack.c.l.b16 %v376
        %v571 = vunpack.c.h.b16 %v376
        %v572 = vunpack.c.l.b16 %v377
        %v573 = vunpack.c.h.b16 %v377
        %v574 = vunpack.c.l.b16 %v378
        %v575 = vunpack.c.h.b16 %v378
        %v576 = vunpack.c.l.b16 %v379
        %v577 = vunpack.c.h.b16 %v379
        %v578 = vunpack.c.l.b16 %v380
        %v579 = vunpack.c.h.b16 %v380
        %v580 = vunpack.c.l.b16 %v381
        %v581 = vunpack.c.h.b16 %v381
        %v582 = vunpack.c.l.b16 %v382
        %v583 = vunpack.c.h.b16 %v382
        %v584 = vunpack.c.l.b16 %v383
        %v585 = vunpack.c.h.b16 %v383
        %v586 = vunpack.c.l.b16 %v384
        %v587 = vunpack.c.h.b16 %v384
        %v588 = vunpack.c.l.b16 %v385
        %v589 = vunpack.c.h.b16 %v385
        %v590 = vunpack.c.l.b16 %v386
        %v591 = vunpack.c.h.b16 %v386
        %v592 = vunpack.c.l.b16 %v387
        %v593 = vunpack.c.h.b16 %v387
        %v594 = vunpack.c.l.b16 %v388
        %v595 = vunpack.c.h.b16 %v388
        %v596 = vunpack.c.l.b16 %v389
        %v597 = vunpack.c.h.b16 %v389
        %v598 = vunpack.c.l.b16 %v390
        %v599 = vunpack.c.h.b16 %v390
        %v600 = vunpack.c.l.b16 %v391
        %v601 = vunpack.c.h.b16 %v391
        %v602 = vunpack.c.l.b16 %v392
        %v603 = vunpack.c.h.b16 %v392
        %v604 = vunpack.c.l.b16 %v393
        %v605 = vunpack.c.h.b16 %v393
        %v606 = vunpack.c.l.b16 %v394
        %v607 = vunpack.c.h.b16 %v394
        %v608 = vunpack.c.l.b16 %v395
        %v609 = vunpack.c.h.b16 %v395
        %v610 = vunpack.c.l.b16 %v396
        %v611 = vunpack.c.h.b16 %v396
        %v612 = vunpack.c.l.b16 %v397
        %v613 = vunpack.c.h.b16 %v397
        %v614 = vunpack.c.l.b16 %v398
        %v615 = vunpack.c.h.b16 %v398
        %v616 = vunpack.c.l.b16 %v399
        %v617 = vunpack.c.h.b16 %v399
        %v618 = vunpack.c.l.b16 %v400
        %v619 = vunpack.c.h.b16 %v400
        %v620 = vunpack.c.l.b16 %v401
        %v621 = vunpack.c.h.b16 %v401
        %v622 = vunpack.c.l.b16 %v402
        %v623 = vunpack.c.h.b16 %v402
        %v624 = vpack.c.b16 %v500, %v496
        %v625 = vpack.c.b16 %v501, %v497
        %v626 = vpack.c.b16 %v502, %v498
        %v627 = vpack.c.b16 %v503, %v499
        %v628 = vpack.c.b16 %v508, %v504
        %v629 = vpack.c.b16 %v509, %v505
        %v630 = vpack.c.b16 %v510, %v506
        %v631 = vpack.c.b16 %v511, %v507
        %v632 = vpack.c.b16 %v516, %v512
        %v633 = vpack.c.b16 %v517, %v513
        %v634 = vpack.c.b16 %v518, %v514
        %v635 = vpack.c.b16 %v519, %v515
        %v636 = vpack.c.b16 %v524, %v520
        %v637 = vpack.c.b16 %v525, %v521
        %v638 = vpack.c.b16 %v526, %v522
        %v639 = vpack.c.b16 %v527, %v523
        %v640 = vpack.c.b16 %v532, %v528
        %v641 = vpack.c.b16 %v533, %v529
        %v642 = vpack.c.b16 %v534, %v530
        %v643 = vpack.c.b16 %v535, %v531
        %v644 = vpack.c.b16 %v540, %v536
        %v645 = vpack.c.b16 %v541, %v537
        %v646 = vpack.c.b16 %v542, %v538
        %v647 = vpack.c.b16 %v543, %v539
        %v648 = vpack.c.b16 %v548, %v544
        %v649 = vpack.c.b16 %v549, %v545
        %v650 = vpack.c.b16 %v550, %v546
        %v651 = vpack.c.b16 %v551, %v547
        %v652 = vpack.c.b16 %v556, %v552
        %v653 = vpack.c.b16 %v557, %v553
        %v654 = vpack.c.b16 %v558, %v554
        %v655 = vpack.c.b16 %v559, %v555
        %v656 = vpack.c.b16 %v564, %v560
        %v657 = vpack.c.b16 %v565, %v561
        %v658 = vpack.c.b16 %v566, %v562
        %v659 = vpack.c.b16 %v567, %v563
        %v660 = vpack.c.b16 %v572, %v568
        %v661 = vpack.c.b16 %v573, %v569
        %v662 = vpack.c.b16 %v574, %v570
        %v663 = vpack.c.b16 %v575, %v571
        %v664 = vpack.c.b16 %v580, %v576
        %v665 = vpack.c.b16 %v581, %v577
        %v666 = vpack.c.b16 %v582, %v578
        %v667 = vpack.c.b16 %v583, %v579
        %v668 = vpack.c.b16 %v588, %v584
        %v669 = vpack.c.b16 %v589, %v585
        %v670 = vpack.c.b16 %v590, %v586
        %v671 = vpack.c.b16 %v591, %v587
        %v672 = vpack.c.b16 %v596, %v592
        %v673 = vpack.c.b16 %v597, %v593
        %v674 = vpack.c.b16 %v598, %v594
        %v675 = vpack.c.b16 %v599, %v595
        %v676 = vpack.c.b16 %v604, %v600
        %v677 = vpack.c.b16 %v605, %v601
        %v678 = vpack.c.b16 %v606, %v602
        %v679 = vpack.c.b16 %v607, %v603
        %v680 = vpack.c.b16 %v612, %v608
        %v681 = vpack.c.b16 %v613, %v609
        %v682 = vpack.c.b16 %v614, %v610
        %v683 = vpack.c.b16 %v615, %v611
        %v684 = vpack.c.b16 %v620, %v616
        %v685 = vpack.c.b16 %v621, %v617
        %v686 = vpack.c.b16 %v622, %v618
        %v687 = vpack.c.b16 %v623, %v619
        %752 = vmatprep.subr.bf16.mxu0 %v653
        %753 = vmatpush1.bf16.msra.mxu0 %v652
        %754 = vmatprep.subr.bf16.mxu0 %v649
        %755 = vmatpush1.bf16.msra.mxu0 %v648
        %756 = vmatprep.subr.bf16.mxu0 %v645
        %757 = vmatpush1.bf16.msra.mxu0 %v644
        %758 = vmatprep.subr.bf16.mxu0 %v641
        %759 = vmatpush1.bf16.msra.mxu0 %v640
        %760 = vmatprep.subr.bf16.mxu0 %v637
        %761 = vmatpush1.bf16.msra.mxu0 %v636
        %762 = vmatprep.subr.bf16.mxu0 %v633
        %763 = vmatpush1.bf16.msra.mxu0 %v632
        %764 = vmatprep.subr.bf16.mxu0 %v629
        %765 = vmatpush1.bf16.msra.mxu0 %v628
        %766 = vmatprep.subr.bf16.mxu0 %v625
        %767 = vmatpush1.bf16.msra.mxu0 %v624
        %768 = vmatprep.subr.bf16.mxu0 %v685
        %769 = vmatpush2.bf16.msra.mxu0 %v684
        %770 = vmatprep.subr.bf16.mxu0 %v681
        %771 = vmatpush2.bf16.msra.mxu0 %v680
        %772 = vmatprep.subr.bf16.mxu0 %v677
        %773 = vmatpush2.bf16.msra.mxu0 %v676
        %774 = vmatprep.subr.bf16.mxu0 %v673
        %775 = vmatpush2.bf16.msra.mxu0 %v672
        %776 = vmatprep.subr.bf16.mxu0 %v669
        %777 = vmatpush2.bf16.msra.mxu0 %v668
        %778 = vmatprep.subr.bf16.mxu0 %v665
        %779 = vmatpush2.bf16.msra.mxu0 %v664
        %780 = vmatprep.subr.bf16.mxu0 %v661
        %781 = vmatpush2.bf16.msra.mxu0 %v660
        %782 = vmatprep.subr.bf16.mxu0 %v657
        %783 = vmatpush2.bf16.msra.mxu0 %v656
        %784 = vmatprep.mubr.bf16.mxu0 %v429
        %785 = vmatmul.mubr.bf16.gmra.mxu0 %v428
        %v786 = vpop.f32.mrf.mxu0
        %v787 = vadd.f32 %v408, %v786
        %v788 = vpop.f32.mrf.mxu0
        %v789 = vadd.f32 %v412, %v788
        %v790 = vpop.f32.mrf.mxu0
        %v791 = vpop.f32.mrf.mxu0
        %792 = vdwg.mxu0
        %793 = vmatprep.subr.bf16.mxu0 %v655
        %794 = vmatpush1.bf16.msra.mxu0 %v654
        %795 = vmatprep.subr.bf16.mxu0 %v651
        %796 = vmatpush1.bf16.msra.mxu0 %v650
        %797 = vmatprep.subr.bf16.mxu0 %v647
        %798 = vmatpush1.bf16.msra.mxu0 %v646
        %799 = vmatprep.subr.bf16.mxu0 %v643
        %800 = vmatpush1.bf16.msra.mxu0 %v642
        %801 = vmatprep.subr.bf16.mxu0 %v639
        %802 = vmatpush1.bf16.msra.mxu0 %v638
        %803 = vmatprep.subr.bf16.mxu0 %v635
        %804 = vmatpush1.bf16.msra.mxu0 %v634
        %805 = vmatprep.subr.bf16.mxu0 %v631
        %806 = vmatpush1.bf16.msra.mxu0 %v630
        %807 = vmatprep.subr.bf16.mxu0 %v627
        %808 = vmatpush1.bf16.msra.mxu0 %v626
        %809 = vmatprep.subr.bf16.mxu0 %v687
        %810 = vmatpush2.bf16.msra.mxu0 %v686
        %811 = vmatprep.subr.bf16.mxu0 %v683
        %812 = vmatpush2.bf16.msra.mxu0 %v682
        %813 = vmatprep.subr.bf16.mxu0 %v679
        %814 = vmatpush2.bf16.msra.mxu0 %v678
        %815 = vmatprep.subr.bf16.mxu0 %v675
        %816 = vmatpush2.bf16.msra.mxu0 %v674
        %817 = vmatprep.subr.bf16.mxu0 %v671
        %818 = vmatpush2.bf16.msra.mxu0 %v670
        %819 = vmatprep.subr.bf16.mxu0 %v667
        %820 = vmatpush2.bf16.msra.mxu0 %v666
        %821 = vmatprep.subr.bf16.mxu0 %v663
        %822 = vmatpush2.bf16.msra.mxu0 %v662
        %823 = vmatprep.subr.bf16.mxu0 %v659
        %824 = vmatpush2.bf16.msra.mxu0 %v658
        %825 = vmatprep.mubr.bf16.mxu0 %v429
        %826 = vmatmul.mubr.bf16.gmra.mxu0 %v428
        %v827 = vpop.f32.mrf.mxu0
        %v828 = vadd.f32 %v416, %v827
        %v829 = vpop.f32.mrf.mxu0
        %v830 = vadd.f32 %v420, %v829
        %v831 = vpop.f32.mrf.mxu0
        %v832 = vpop.f32.mrf.mxu0
        %833 = vdwg.mxu0
        %v834 = vxor.u32 %v787, 2147483648
        %v835 = vxor.u32 %v789, 2147483648
        %v836 = vxor.u32 %v828, 2147483648
        %v837 = vxor.u32 %v830, 2147483648
        %v838 = vmul.f32 %v834, 1.442695
        %v839 = vpow.pop %v838
        %v840 = vmul.f32 %v835, 1.442695
        %v841 = vpow.pop %v840
        %v842 = vmul.f32 %v836, 1.442695
        %v843 = vpow.pop %v842
        %v844 = vmul.f32 %v837, 1.442695
        %v845 = vpow.pop %v844
        %v846 = vadd.f32 %v839, 1.0
        %v847 = vadd.f32 %v841, 1.0
        %v848 = vadd.f32 %v843, 1.0
        %v849 = vadd.f32 %v845, 1.0
        %v850 = vrcp.pop %v846
        %v851 = vmul.f32 1.0, %v850
        %v852 = vrcp.pop %v847
        %v853 = vmul.f32 1.0, %v852
        %v854 = vrcp.pop %v848
        %v855 = vmul.f32 1.0, %v854
        %v856 = vrcp.pop %v849
        %v857 = vmul.f32 1.0, %v856
        %858 = vst [vmem:[%s336] sm:$0xff] %v851
        %859 = vst [vmem:[%s336 + $0x8] sm:$0xff] %v853
        %860 = vst [vmem:[%s336 + $0x10] sm:$0xff] %v855
        %861 = vst [vmem:[%s336 + $0x18] sm:$0xff] %v857
        %s862 = smul.u32 4, %s14
        %p863 = scmp.lt.s32.totalorder %s862, 7
        %s864 = scalar_select %p863, %s862, 7
        %s865 = smul.addr %s864, 8
        %s866 = scalar_lea.vmem %s3, %s865
        // Predicated region
        $region56: #{autoencoder_forward.3} parent=50 // pred_check
          %p867 = pneg %p105
        $region57: #{autoencoder_forward.3} parent=50 // pred_check_branch
          %869 = sbr.rel (%p867) target = $region59
        $region58: #{autoencoder_forward.3} parent=50 // pred_region
          %s870 = smul.u32 4, %s14
        $region59: #{autoencoder_forward.3} parent=50 // pred_fallthru
          _
      $region51: #{autoencoder_forward.3} parent=5 // pred_fallthru
        _
      %p871 = scmp.le.s32.totalorder 2, %s9
      // Predicated region
      $region60: #{autoencoder_forward.3} parent=5 // pred_check
        %p872 = pneg %p871
      $region61: #{autoencoder_forward.3} parent=5 // pred_check_branch
        %874 = sbr.rel (%p872) target = $region63
      $region62: #{autoencoder_forward.3} parent=5 // pred_region
        %s875 = ssub.s32 %s9, 2
        // Predicated region
        $region64: #{autoencoder_forward.3} parent=62 // pred_check
          %p876 = pneg %p111
        $region65: #{autoencoder_forward.3} parent=62 // pred_check_branch
          %878 = sbr.rel (%p876) target = $region67
        $region66: #{autoencoder_forward.3} parent=62 // pred_region
          %s879 = smul.u32 4, %s15
          %p880 = scmp.lt.s32.totalorder %s879, 7
          %s881 = scalar_select %p880, %s879, 7
          %s882 = smul.addr %s881, 8
          %s883 = scalar_lea.vmem %s3, %s882
        $region67: #{autoencoder_forward.3} parent=62 // pred_fallthru
          _
      $region63: #{autoencoder_forward.3} parent=5 // pred_fallthru
        _
    $region6: #{autoencoder_forward.3} parent=1 // loop_footer
      %s13 = sadd.s32 1, %s9
    $region7: #{autoencoder_forward.3} parent=1 // loop_footer_branch
      %8 = sbr.rel target = $region3
    $region8: #{autoencoder_forward.3} parent=1 // loop_exit
      _

</llo_original>
